<compile_context>
chip_gen: v6e
topology: v6e:2x2x1
jax: 0.10.0
libtpu: 0.0.40
codegen_flags: <defaults>
</compile_context>

<pallas_src>
import math
import functools

import jax
import jax.numpy as jnp
from jax.experimental import pallas as pl
from jax.experimental.pallas import tpu as pltpu


# ------------------------------ small helpers ------------------------------

def _tile(dim, target, align):
    """Largest tile <= target that divides dim and is a multiple of `align`; else full dim."""
    if dim <= target:
        return dim
    t = (target // align) * align
    while t >= align:
        if dim % t == 0:
            return t
        t -= align
    return dim


def _nbytes(shape, dtype):
    return math.prod(shape) * jnp.dtype(dtype).itemsize


def _vmem_limit(*block_bytes):
    """Scoped-VMEM request from the actual block bytes (double-buffered) + headroom."""
    total = 2 * sum(block_bytes) + (2 << 20)
    return int(min(max(total, 4 << 20), 56 << 20))   # stays under v7x's 64 MiB physical


# ----------------------------- generic tiled linear -----------------------------

def _linear_kernel(x_ref, w_ref, b_ref, o_ref, acc_ref, *, relu):
    """Tiled  y = x @ w + b  (optional ReLU).  bf16 operands, fp32 accumulation."""
    k = pl.program_id(2)

    @pl.when(k == 0)
    def _():
        acc_ref[...] = jnp.zeros_like(acc_ref)

    acc_ref[...] += jnp.dot(x_ref[...], w_ref[...],
                            preferred_element_type=jnp.float32)

    @pl.when(k == pl.num_programs(2) - 1)
    def _():
        y = acc_ref[...] + b_ref[...]
        if relu:
            y = jnp.maximum(y, 0.0)
        o_ref[...] = y.astype(o_ref.dtype)


def linear_pallas(x, w, b, relu=False, *, out_dtype=jnp.bfloat16, tm=512, tn=512, tk=512):
    """x: (..., K) bf16 activation, w: (K, N) bf16 (pre-transposed), b: (N,) fp32."""
    *lead, K = x.shape
    M = math.prod(lead) if lead else 1
    N = w.shape[1]
    xb = x.reshape(M, K)                   # activations arrive in bf16 (no wrapper cast)
    b2 = b.reshape(1, N)

    btm, btn, btk = _tile(M, tm, 8), _tile(N, tn, 128), _tile(K, tk, 128)
    grid = (M // btm, N // btn, K // btk)
    vmem = _vmem_limit(_nbytes((btm, btk), xb.dtype), _nbytes((btk, btn), w.dtype),
                       _nbytes((1, btn), jnp.float32), _nbytes((btm, btn), out_dtype),
                       _nbytes((btm, btn), jnp.float32))

    out = pl.pallas_call(
        functools.partial(_linear_kernel, relu=relu),
        out_shape=jax.ShapeDtypeStruct((M, N), out_dtype),
        grid=grid,
        in_specs=[pl.BlockSpec((btm, btk), lambda i, j, k: (i, k)),
                  pl.BlockSpec((btk, btn), lambda i, j, k: (k, j)),
                  pl.BlockSpec((1, btn), lambda i, j, k: (0, j))],
        out_specs=pl.BlockSpec((btm, btn), lambda i, j, k: (i, j)),
        scratch_shapes=[pltpu.VMEM((btm, btn), jnp.float32)],
        compiler_params=pltpu.CompilerParams(
            dimension_semantics=("parallel", "parallel", "arbitrary"),
            vmem_limit_bytes=vmem),
        cost_estimate=pl.CostEstimate(
            flops=2 * M * N * K, transcendentals=0,
            bytes_accessed=_nbytes((M, K), xb.dtype) + _nbytes((K, N), w.dtype)
                           + _nbytes((M, N), out_dtype)),
    )(xb, w, b2)
    return out.reshape(*lead, N)


# -------------- fused q-proj -> cross MHA -> out-proj -> residual -> LN --------------

def _cross_attn_ln_kernel(x_ref, kt_ref, vt_ref, m_ref, gm_ref,
                          wq_ref, bq_ref, bo_ref, g_ref, be_ref,
                          o_ref, *, scale, eps):
    """x: (tq,H) bf16, kt: (H,S) bf16 (block-diag K~), vt: (S,H) bf16 (V~ = V_h @ Wo_h),
    m: (tq,1) fp32 query mask, gm: (S,S) fp32 per-head group-sum matrix."""
    x = x_ref[...]                                                    # (tq, H) bf16
    # Q projection for all heads (fp32 accumulation)
    q = jnp.dot(x, wq_ref[...], preferred_element_type=jnp.float32) + bq_ref[...]
    # scores for every head at once via the block-diagonal K~ : (tq, n_head*Lk)
    s = jnp.dot(q.astype(jnp.bfloat16), kt_ref[...],
                preferred_element_type=jnp.float32) * scale
    # query-row masked_fill (== torch masked_fill(mask==0, -10000)), applied once, no head loop
    s = jnp.where(m_ref[...] == 0.0, -10000.0, s)
    # per-head softmax; subtracting a per-row constant is valid for every head group
    s = s - jnp.max(s, axis=-1, keepdims=True)
    e = jnp.exp(s)                                                    # fp32
    z = jnp.dot(e, gm_ref[...], preferred_element_type=jnp.float32)   # per-head sums, repeated
    p = e * pl.reciprocal(z, approx=True)
    # context @ Wo folded into V~  ->  one lane-dense MXU matmul, single full-width result
    ctx = jnp.dot(p.astype(jnp.bfloat16), vt_ref[...],
                  preferred_element_type=jnp.float32)
    y = ctx + bo_ref[...] + x.astype(jnp.float32)                     # residual (fp32)
    mean = jnp.mean(y, axis=-1, keepdims=True)
    var = jnp.mean(jnp.square(y - mean), axis=-1, keepdims=True)
    o_ref[...] = ((y - mean) * jax.lax.rsqrt(var + eps) * g_ref[...]
                  + be_ref[...]).astype(o_ref.dtype)


def cross_attn_ln_pallas(x, ktil, vtil, mask_f, gmat, wq, bq, bo, ln_g, ln_b,
                         *, n_head, eps=1e-12, tq=256):
    B, L, H = x.shape
    S = ktil.shape[-1]
    d = H // n_head
    scale = 1.0 / math.sqrt(d)
    btq = _tile(L, tq, 8)
    grid = (B, L // btq)

    vmem = _vmem_limit(
        _nbytes((btq, H), x.dtype), _nbytes((H, S), ktil.dtype),
        _nbytes((S, H), vtil.dtype), _nbytes((btq, 1), jnp.float32),
        _nbytes((S, S), jnp.float32), _nbytes((H, H), wq.dtype),
        4 * _nbytes((1, H), jnp.float32), _nbytes((btq, H), jnp.bfloat16))

    return pl.pallas_call(
        functools.partial(_cross_attn_ln_kernel, scale=scale, eps=eps),
        out_shape=jax.ShapeDtypeStruct((B, L, H), jnp.bfloat16),
        grid=grid,
        in_specs=[pl.BlockSpec((None, btq, H), lambda b, i: (b, i, 0)),
                  pl.BlockSpec((None, H, S), lambda b, i: (b, 0, 0)),
                  pl.BlockSpec((None, S, H), lambda b, i: (b, 0, 0)),
                  pl.BlockSpec((None, btq, 1), lambda b, i: (b, i, 0)),
                  pl.BlockSpec((S, S), lambda b, i: (0, 0)),
                  pl.BlockSpec((H, H), lambda b, i: (0, 0)),
                  pl.BlockSpec((1, H), lambda b, i: (0, 0)),
                  pl.BlockSpec((1, H), lambda b, i: (0, 0)),
                  pl.BlockSpec((1, H), lambda b, i: (0, 0)),
                  pl.BlockSpec((1, H), lambda b, i: (0, 0))],
        out_specs=pl.BlockSpec((None, btq, H), lambda b, i: (b, i, 0)),
        compiler_params=pltpu.CompilerParams(
            dimension_semantics=("parallel", "parallel"),
            vmem_limit_bytes=vmem),
        cost_estimate=pl.CostEstimate(
            flops=2 * B * L * (H * H + H * S + S * S + S * H) + 10 * B * L * H,
            transcendentals=B * L * (S + 2),
            bytes_accessed=2 * _nbytes((B, L, H), jnp.bfloat16)
                           + _nbytes((B, H, S), ktil.dtype) + _nbytes((B, S, H), vtil.dtype)
                           + _nbytes((H, H), wq.dtype)),
    )(x, ktil, vtil, mask_f, gmat, wq, bq.reshape(1, H), bo.reshape(1, H),
      ln_g.reshape(1, H), ln_b.reshape(1, H))


# ----------------- fused FFN (fc1 + ReLU + fc2) -> residual -> LN -----------------

def _ffn_ln_kernel(x_ref, w1_ref, b1_ref, w2_ref, b2_ref, g_ref, be_ref,
                   o_ref, *, eps):
    x = x_ref[...]                                                    # (tm, H) bf16
    h = jnp.dot(x, w1_ref[...], preferred_element_type=jnp.float32) + b1_ref[...]
    h = jnp.maximum(h, 0.0)
    y = jnp.dot(h.astype(jnp.bfloat16), w2_ref[...],
                preferred_element_type=jnp.float32) + b2_ref[...]
    y = y + x.astype(jnp.float32)                                     # residual (fp32)
    mean = jnp.mean(y, axis=-1, keepdims=True)
    var = jnp.mean(jnp.square(y - mean), axis=-1, keepdims=True)
    o_ref[...] = ((y - mean) * jax.lax.rsqrt(var + eps) * g_ref[...]
                  + be_ref[...]).astype(o_ref.dtype)


def ffn_ln_pallas(x, w1, b1, w2, b2, ln_g, ln_b, *, eps=1e-12, tm=256):
    *lead, H = x.shape
    M = math.prod(lead) if lead else 1
    F = w1.shape[1]
    xb = x.reshape(M, H)
    btm = _tile(M, tm, 8)
    grid = (M // btm,)
    vmem = _vmem_limit(_nbytes((btm, H), xb.dtype), _nbytes((H, F), w1.dtype),
                       _nbytes((F, H), w2.dtype), _nbytes((1, F), jnp.float32),
                       3 * _nbytes((1, H), jnp.float32), _nbytes((btm, H), jnp.bfloat16))

    out = pl.pallas_call(
        functools.partial(_ffn_ln_kernel, eps=eps),
        out_shape=jax.ShapeDtypeStruct((M, H), jnp.bfloat16),
        grid=grid,
        in_specs=[pl.BlockSpec((btm, H), lambda i: (i, 0)),
                  pl.BlockSpec((H, F), lambda i: (0, 0)),
                  pl.BlockSpec((1, F), lambda i: (0, 0)),
                  pl.BlockSpec((F, H), lambda i: (0, 0)),
                  pl.BlockSpec((1, H), lambda i: (0, 0)),
                  pl.BlockSpec((1, H), lambda i: (0, 0)),
                  pl.BlockSpec((1, H), lambda i: (0, 0))],
        out_specs=pl.BlockSpec((btm, H), lambda i: (i, 0)),
        compiler_params=pltpu.CompilerParams(
            dimension_semantics=("parallel",),
            vmem_limit_bytes=vmem),
        cost_estimate=pl.CostEstimate(
            flops=4 * M * H * F + 10 * M * H, transcendentals=M,
            bytes_accessed=2 * _nbytes((M, H), jnp.bfloat16)
                           + _nbytes((H, F), w1.dtype) + _nbytes((F, H), w2.dtype)),
    )(xb, w1, b1.reshape(1, F), w2, b2.reshape(1, H),
      ln_g.reshape(1, H), ln_b.reshape(1, H))
    return out.reshape(*lead, H)


# ------------------------- model building blocks -------------------------

def encoder_layer(p, x, y_kv, mask_f, n_head):
    """EncoderLayer: cross MHA(q=x, k=v=y) + LN, FFN + LN.  Dropout = identity (inference).

    Because Lk = obj_num is tiny, multi-head attention collapses into lane-dense matmuls:
      S = (x Wq + bq) @ K~   (K~ block-diagonal per head)
      P = per-head softmax(S) (per-head sums via the constant group matrix G)
      out = P @ V~            (V~ = per-head V @ Wo, so the out-projection is folded in)
    and the whole q-proj/attention/out-proj/residual/LN chain runs in one kernel.
    """
    B, L, H = x.shape
    Lk = y_kv.shape[1]
    d = H // n_head
    S = n_head * Lk

    k = linear_pallas(y_kv, p['wk'], p['bk'])                         # (B, Lk, H) bf16
    v = linear_pallas(y_kv, p['wv'], p['bv'])                         # (B, Lk, H) bf16

    # Tiny per-batch rearrangements (B*H*S / B*S*H elements) -> plain JAX glue.
    eye = jnp.eye(n_head, dtype=jnp.bfloat16)
    ktil = jnp.einsum('bkhd,hg->bhdgk',
                      k.reshape(B, Lk, n_head, d), eye).reshape(B, H, S)
    wo_h = p['wo'].astype(jnp.float32).reshape(n_head, d, H)
    vtil = jnp.einsum('bkhd,hdo->bhko',
                      v.reshape(B, Lk, n_head, d).astype(jnp.float32),
                      wo_h).reshape(B, S, H).astype(jnp.bfloat16)
    gmat = jnp.kron(jnp.eye(n_head, dtype=jnp.float32),
                    jnp.ones((Lk, Lk), jnp.float32))                  # (S, S)

    x1 = cross_attn_ln_pallas(x, ktil, vtil, mask_f, gmat, p['wq'], p['bq'],
                              p['bo'], p['ln1_g'], p['ln1_b'], n_head=n_head)
    x2 = ffn_ln_pallas(x1, p['fc1_w'], p['fc1_b'], p['fc2_w'], p['fc2_b'],
                       p['ln2_g'], p['ln2_b'])
    return x2


def bert_entity_encoder_forward(params, token, att_mask, pos1, pos2, pic, rel,
                                *, obj_num, pic_feat, n_head):
    """Mirror of BERTEntityEncoder.forward (rel is accepted but unused, as in torch)."""
    B, L = token.shape

    # TODO(synk): BertModel.from_pretrained backbone replaced by a deterministic
    # embedding lookup (pretrained checkpoint load has no Pallas equivalent).
    hidden = params['emb'][token]                                     # (B, L, Hb) bf16

    # scatter_-built one-hots + masked sum  ==  gather of head/tail token states
    bidx = jnp.arange(B)
    head_hidden = hidden[bidx, pos1[:, 0]]                            # (B, Hb)
    tail_hidden = hidden[bidx, pos2[:, 0]]                            # (B, Hb)
    x = jnp.concatenate([head_hidden, tail_hidden], axis=-1)          # (B, 2*Hb) bf16

    hidden_rel = linear_pallas(hidden, params['lin_hidden_w'], params['lin_hidden_b'])
    pic3 = pic.reshape(B, obj_num, pic_feat).astype(jnp.bfloat16)     # raw input cast (tiny)
    pic3 = linear_pallas(pic3, params['lin_pic_w'], params['lin_pic_b'])   # (B, N, H) bf16

    # NOTE: EncoderLayer1's output is never used downstream in the reference forward
    # (it is overwritten before the pooling) -> removed explicitly, not left to DCE.

    # enc2 mask only depends on the query position -> pass as (B, L, 1), broadcast in-kernel.
    mask_f = att_mask.astype(jnp.float32)[:, :, None]

    hidden_rel_att = encoder_layer(params['enc2'], hidden_rel, pic3, mask_f, n_head)

    hidden_rel_pooled = jnp.mean(hidden_rel_att.astype(jnp.float32), axis=1)  # avg_pool1d over L
    pic_out = jnp.mean(pic3.astype(jnp.float32), axis=1)                      # avg_pool1d over N

    xcat = jnp.concatenate([x, pic_out.astype(jnp.bfloat16),
                            hidden_rel_pooled.astype(jnp.bfloat16)], axis=-1)  # (B, 3H) bf16
    out = linear_pallas(xcat, params['lin_final_w'], params['lin_final_b'],
                        out_dtype=jnp.float32)                                # (B, H) fp32
    return out


# ------------------------- deterministic parameters -------------------------

def _dense(key, in_dim, out_dim):
    """Weight stored pre-transposed (K, N) in bf16 (MXU layout); bias fp32."""
    w = (0.02 * jax.random.normal(key, (in_dim, out_dim), jnp.float32)).astype(jnp.bfloat16)
    b = jnp.zeros((out_dim,), jnp.float32)
    return w, b


def init_encoder_layer(key, H, ffn_hidden):
    ks = jax.random.split(key, 6)
    p = {}
    p['wq'], p['bq'] = _dense(ks[0], H, H)
    p['wk'], p['bk'] = _dense(ks[1], H, H)
    p['wv'], p['bv'] = _dense(ks[2], H, H)
    p['wo'], p['bo'] = _dense(ks[3], H, H)
    p['ln1_g'] = jnp.ones((H,), jnp.float32)
    p['ln1_b'] = jnp.zeros((H,), jnp.float32)
    p['ln2_g'] = jnp.ones((H,), jnp.float32)
    p['ln2_b'] = jnp.zeros((H,), jnp.float32)
    p['fc1_w'], p['fc1_b'] = _dense(ks[4], H, ffn_hidden)
    p['fc2_w'], p['fc2_b'] = _dense(ks[5], ffn_hidden, H)
    return p


def init_params(key, vocab, Hb, H, pic_feat):
    ks = jax.random.split(key, 5)
    params = {'emb': (0.02 * jax.random.normal(ks[0], (vocab, Hb), jnp.float32)
                      ).astype(jnp.bfloat16)}
    params['lin_hidden_w'], params['lin_hidden_b'] = _dense(ks[1], Hb, H)
    params['lin_pic_w'], params['lin_pic_b'] = _dense(ks[2], pic_feat, H)
    params['lin_final_w'], params['lin_final_b'] = _dense(ks[3], 3 * H, H)
    params['enc2'] = init_encoder_layer(ks[4], H, H)
    # NOTE: linear_q/k/v/q2/k2/v2/q3/k3/v3, linear_final1, linear_merge, linear,
    # EncoderLayer1/3/4 are defined in __init__ but never affect forward's output -> omitted.
    return params


# ----------------------------------- main -----------------------------------

if __name__ == "__main__":
    # small shapes consistent with the module (hidden = 2 * bert_hidden, etc.)
    B, L = 2, 8
    Hb = 32            # BERT hidden size  (= hidden_size // 2)
    H = 2 * Hb         # module hidden_size
    PIC_FEAT = 128     # stand-in for pic_feat = 2048
    OBJ = 4            # stand-in for obj_num = 10
    N_HEAD = 8
    VOCAB = 100

    key = jax.random.PRNGKey(0)
    k_par, k_tok, k_pic, k_rel = jax.random.split(key, 4)
    params = init_params(k_par, VOCAB, Hb, H, PIC_FEAT)

    token = jax.random.randint(k_tok, (B, L), 0, VOCAB)
    att_mask = jnp.array([[1] * L, [1] * 6 + [0] * 2], dtype=jnp.int32)
    pos1 = jnp.array([[1], [2]], dtype=jnp.int32)
    pos2 = jnp.array([[4], [5]], dtype=jnp.int32)
    pic = jax.random.normal(k_pic, (B, OBJ * PIC_FEAT), jnp.float32)
    rel = jax.random.normal(k_rel, (B, OBJ * L), jnp.float32)   # unused by forward

    fwd = jax.jit(functools.partial(bert_entity_encoder_forward,
                                    obj_num=OBJ, pic_feat=PIC_FEAT, n_head=N_HEAD))
    out = fwd(params, token, att_mask, pos1, pos2, pic, rel)
    jax.block_until_ready(out)
    assert out.shape == (B, H) and out.dtype == jnp.float32
    print("KERNEL_OK")
</pallas_src>

<mosaic_0001>
module attributes {stable_mosaic.version = 11 : i64} {
  func.func @_linear_kernel(%arg0: i32, %arg1: i32, %arg2: i32, %arg3: memref<8x128xbf16, #tpu.memory_space<vmem>>, %arg4: memref<128x64xbf16, #tpu.memory_space<vmem>>, %arg5: memref<1x64xf32, #tpu.memory_space<vmem>>, %arg6: memref<8x64xbf16, #tpu.memory_space<vmem>>, %arg7: memref<8x64xf32, #tpu.memory_space<vmem>>) attributes {dimension_semantics = [#tpu.dimension_semantics<parallel>, #tpu.dimension_semantics<parallel>, #tpu.dimension_semantics<arbitrary>], iteration_bounds = array<i64: 1, 1, 1>, scalar_prefetch = 0 : i64, scratch_operands = 1 : i64, tpu.core_type = #tpu.core_type<tc>, window_params = [{transform_indices = @transform_0, window_bounds = array<i64: 8, 128>}, {transform_indices = @transform_1, window_bounds = array<i64: 128, 64>}, {transform_indices = @transform_2, window_bounds = array<i64: 1, 64>}, {transform_indices = @transform_3, window_bounds = array<i64: 8, 64>}]} {
    %c0_i32 = arith.constant 0 : i32
    %0 = arith.cmpi eq, %arg2, %c0_i32 : i32
    %1 = arith.extui %0 : i1 to i32
    %c0_i32_0 = arith.constant 0 : i32
    %2 = arith.cmpi ne, %1, %c0_i32_0 : i32
    scf.if %2 {
      %cst_10 = arith.constant 0.000000e+00 : f32
      %12 = vector.broadcast %cst_10 : f32 to vector<8x64xf32>
      %c0_11 = arith.constant 0 : index
      %c0_12 = arith.constant 0 : index
      %13 = vector.load %arg7[%c0_11, %c0_12] : memref<8x64xf32, #tpu.memory_space<vmem>>, vector<8x64xf32>
      tpu.vector_store %arg7[%c0_11, %c0_12], %12 {strides = array<i32>} : memref<8x64xf32, #tpu.memory_space<vmem>>, vector<8x64xf32>,
    } else {
    }
    %c0 = arith.constant 0 : index
    %c0_1 = arith.constant 0 : index
    %3 = vector.load %arg7[%c0, %c0_1] : memref<8x64xf32, #tpu.memory_space<vmem>>, vector<8x64xf32>
    %c0_2 = arith.constant 0 : index
    %c0_3 = arith.constant 0 : index
    %4 = vector.load %arg3[%c0_2, %c0_3] : memref<8x128xbf16, #tpu.memory_space<vmem>>, vector<8x128xbf16>
    %c0_4 = arith.constant 0 : index
    %c0_5 = arith.constant 0 : index
    %5 = vector.load %arg4[%c0_4, %c0_5] : memref<128x64xbf16, #tpu.memory_space<vmem>>, vector<128x64xbf16>
    %cst = arith.constant dense<0.000000e+00> : vector<8x64xf32>
    %6 = tpu.matmul %4, %5, %cst {dimension_numbers = #tpu.dot_dimension_numbers<[1], [0], [0], [1], [0, 0, 1, 1], [], []>} : vector<8x128xbf16>, vector<128x64xbf16>, vector<8x64xf32> -> vector<8x64xf32>
    %7 = arith.addf %3, %6 : vector<8x64xf32>
    %c0_6 = arith.constant 0 : index
    %c0_7 = arith.constant 0 : index
    %8 = vector.load %arg7[%c0_6, %c0_7] : memref<8x64xf32, #tpu.memory_space<vmem>>, vector<8x64xf32>
    tpu.vector_store %arg7[%c0_6, %c0_7], %7 {strides = array<i32>} : memref<8x64xf32, #tpu.memory_space<vmem>>, vector<8x64xf32>,
    %c0_i32_8 = arith.constant 0 : i32
    %9 = arith.cmpi eq, %arg2, %c0_i32_8 : i32
    %10 = arith.extui %9 : i1 to i32
    %c0_i32_9 = arith.constant 0 : i32
    %11 = arith.cmpi ne, %10, %c0_i32_9 : i32
    scf.if %11 {
      %c0_10 = arith.constant 0 : index
      %c0_11 = arith.constant 0 : index
      %12 = vector.load %arg7[%c0_10, %c0_11] : memref<8x64xf32, #tpu.memory_space<vmem>>, vector<8x64xf32>
      %c0_12 = arith.constant 0 : index
      %c0_13 = arith.constant 0 : index
      %13 = vector.load %arg5[%c0_12, %c0_13] : memref<1x64xf32, #tpu.memory_space<vmem>>, vector<1x64xf32>
      %14 = vector.broadcast %13 : vector<1x64xf32> to vector<8x64xf32>
      %15 = arith.addf %12, %14 : vector<8x64xf32>
      %16 = arith.truncf %15 : vector<8x64xf32> to vector<8x64xbf16>
      %c0_14 = arith.constant 0 : index
      %c0_15 = arith.constant 0 : index
      %17 = vector.load %arg6[%c0_14, %c0_15] : memref<8x64xbf16, #tpu.memory_space<vmem>>, vector<8x64xbf16>
      tpu.vector_store %arg6[%c0_14, %c0_15], %16 {strides = array<i32>} : memref<8x64xbf16, #tpu.memory_space<vmem>>, vector<8x64xbf16>,
    } else {
    }
    return
  }
  func.func @transform_0(%arg0: i32, %arg1: i32, %arg2: i32) -> (i32, i32) {
    %c0_i32 = arith.constant 0 : i32
    return %arg0, %arg2 : i32, i32
  }
  func.func @transform_1(%arg0: i32, %arg1: i32, %arg2: i32) -> (i32, i32) {
    %c0_i32 = arith.constant 0 : i32
    return %arg2, %arg1 : i32, i32
  }
  func.func @transform_2(%arg0: i32, %arg1: i32, %arg2: i32) -> (i32, i32) {
    %c0_i32 = arith.constant 0 : i32
    %c0_i32_0 = arith.constant 0 : i32
    return %c0_i32, %arg1 : i32, i32
  }
  func.func @transform_3(%arg0: i32, %arg1: i32, %arg2: i32) -> (i32, i32) {
    %c0_i32 = arith.constant 0 : i32
    return %arg0, %arg1 : i32, i32
  }
}

module attributes {stable_mosaic.version = 11 : i64} {
  func.func @_linear_kernel(%arg0: i32, %arg1: i32, %arg2: i32, %arg3: memref<8x64xbf16, #tpu.memory_space<vmem>>, %arg4: memref<64x64xbf16, #tpu.memory_space<vmem>>, %arg5: memref<1x64xf32, #tpu.memory_space<vmem>>, %arg6: memref<8x64xbf16, #tpu.memory_space<vmem>>, %arg7: memref<8x64xf32, #tpu.memory_space<vmem>>) attributes {dimension_semantics = [#tpu.dimension_semantics<parallel>, #tpu.dimension_semantics<parallel>, #tpu.dimension_semantics<arbitrary>], iteration_bounds = array<i64: 1, 1, 1>, scalar_prefetch = 0 : i64, scratch_operands = 1 : i64, tpu.core_type = #tpu.core_type<tc>, window_params = [{transform_indices = @transform_0, window_bounds = array<i64: 8, 64>}, {transform_indices = @transform_1, window_bounds = array<i64: 64, 64>}, {transform_indices = @transform_2, window_bounds = array<i64: 1, 64>}, {transform_indices = @transform_3, window_bounds = array<i64: 8, 64>}]} {
    %c0_i32 = arith.constant 0 : i32
    %0 = arith.cmpi eq, %arg2, %c0_i32 : i32
    %1 = arith.extui %0 : i1 to i32
    %c0_i32_0 = arith.constant 0 : i32
    %2 = arith.cmpi ne, %1, %c0_i32_0 : i32
    scf.if %2 {
      %cst_10 = arith.constant 0.000000e+00 : f32
      %12 = vector.broadcast %cst_10 : f32 to vector<8x64xf32>
      %c0_11 = arith.constant 0 : index
      %c0_12 = arith.constant 0 : index
      %13 = vector.load %arg7[%c0_11, %c0_12] : memref<8x64xf32, #tpu.memory_space<vmem>>, vector<8x64xf32>
      tpu.vector_store %arg7[%c0_11, %c0_12], %12 {strides = array<i32>} : memref<8x64xf32, #tpu.memory_space<vmem>>, vector<8x64xf32>,
    } else {
    }
    %c0 = arith.constant 0 : index
    %c0_1 = arith.constant 0 : index
    %3 = vector.load %arg7[%c0, %c0_1] : memref<8x64xf32, #tpu.memory_space<vmem>>, vector<8x64xf32>
    %c0_2 = arith.constant 0 : index
    %c0_3 = arith.constant 0 : index
    %4 = vector.load %arg3[%c0_2, %c0_3] : memref<8x64xbf16, #tpu.memory_space<vmem>>, vector<8x64xbf16>
    %c0_4 = arith.constant 0 : index
    %c0_5 = arith.constant 0 : index
    %5 = vector.load %arg4[%c0_4, %c0_5] : memref<64x64xbf16, #tpu.memory_space<vmem>>, vector<64x64xbf16>
    %cst = arith.constant dense<0.000000e+00> : vector<8x64xf32>
    %6 = tpu.matmul %4, %5, %cst {dimension_numbers = #tpu.dot_dimension_numbers<[1], [0], [0], [1], [0, 0, 1, 1], [], []>} : vector<8x64xbf16>, vector<64x64xbf16>, vector<8x64xf32> -> vector<8x64xf32>
    %7 = arith.addf %3, %6 : vector<8x64xf32>
    %c0_6 = arith.constant 0 : index
    %c0_7 = arith.constant 0 : index
    %8 = vector.load %arg7[%c0_6, %c0_7] : memref<8x64xf32, #tpu.memory_space<vmem>>, vector<8x64xf32>
    tpu.vector_store %arg7[%c0_6, %c0_7], %7 {strides = array<i32>} : memref<8x64xf32, #tpu.memory_space<vmem>>, vector<8x64xf32>,
    %c0_i32_8 = arith.constant 0 : i32
    %9 = arith.cmpi eq, %arg2, %c0_i32_8 : i32
    %10 = arith.extui %9 : i1 to i32
    %c0_i32_9 = arith.constant 0 : i32
    %11 = arith.cmpi ne, %10, %c0_i32_9 : i32
    scf.if %11 {
      %c0_10 = arith.constant 0 : index
      %c0_11 = arith.constant 0 : index
      %12 = vector.load %arg7[%c0_10, %c0_11] : memref<8x64xf32, #tpu.memory_space<vmem>>, vector<8x64xf32>
      %c0_12 = arith.constant 0 : index
      %c0_13 = arith.constant 0 : index
      %13 = vector.load %arg5[%c0_12, %c0_13] : memref<1x64xf32, #tpu.memory_space<vmem>>, vector<1x64xf32>
      %14 = vector.broadcast %13 : vector<1x64xf32> to vector<8x64xf32>
      %15 = arith.addf %12, %14 : vector<8x64xf32>
      %16 = arith.truncf %15 : vector<8x64xf32> to vector<8x64xbf16>
      %c0_14 = arith.constant 0 : index
      %c0_15 = arith.constant 0 : index
      %17 = vector.load %arg6[%c0_14, %c0_15] : memref<8x64xbf16, #tpu.memory_space<vmem>>, vector<8x64xbf16>
      tpu.vector_store %arg6[%c0_14, %c0_15], %16 {strides = array<i32>} : memref<8x64xbf16, #tpu.memory_space<vmem>>, vector<8x64xbf16>,
    } else {
    }
    return
  }
  func.func @transform_0(%arg0: i32, %arg1: i32, %arg2: i32) -> (i32, i32) {
    %c0_i32 = arith.constant 0 : i32
    return %arg0, %arg2 : i32, i32
  }
  func.func @transform_1(%arg0: i32, %arg1: i32, %arg2: i32) -> (i32, i32) {
    %c0_i32 = arith.constant 0 : i32
    return %arg2, %arg1 : i32, i32
  }
  func.func @transform_2(%arg0: i32, %arg1: i32, %arg2: i32) -> (i32, i32) {
    %c0_i32 = arith.constant 0 : i32
    %c0_i32_0 = arith.constant 0 : i32
    return %c0_i32, %arg1 : i32, i32
  }
  func.func @transform_3(%arg0: i32, %arg1: i32, %arg2: i32) -> (i32, i32) {
    %c0_i32 = arith.constant 0 : i32
    return %arg0, %arg1 : i32, i32
  }
}

module attributes {stable_mosaic.version = 11 : i64} {
  func.func @_linear_kernel(%arg0: i32, %arg1: i32, %arg2: i32, %arg3: memref<16x32xbf16, #tpu.memory_space<vmem>>, %arg4: memref<32x64xbf16, #tpu.memory_space<vmem>>, %arg5: memref<1x64xf32, #tpu.memory_space<vmem>>, %arg6: memref<16x64xbf16, #tpu.memory_space<vmem>>, %arg7: memref<16x64xf32, #tpu.memory_space<vmem>>) attributes {dimension_semantics = [#tpu.dimension_semantics<parallel>, #tpu.dimension_semantics<parallel>, #tpu.dimension_semantics<arbitrary>], iteration_bounds = array<i64: 1, 1, 1>, scalar_prefetch = 0 : i64, scratch_operands = 1 : i64, tpu.core_type = #tpu.core_type<tc>, window_params = [{transform_indices = @transform_0, window_bounds = array<i64: 16, 32>}, {transform_indices = @transform_1, window_bounds = array<i64: 32, 64>}, {transform_indices = @transform_2, window_bounds = array<i64: 1, 64>}, {transform_indices = @transform_3, window_bounds = array<i64: 16, 64>}]} {
    %c0_i32 = arith.constant 0 : i32
    %0 = arith.cmpi eq, %arg2, %c0_i32 : i32
    %1 = arith.extui %0 : i1 to i32
    %c0_i32_0 = arith.constant 0 : i32
    %2 = arith.cmpi ne, %1, %c0_i32_0 : i32
    scf.if %2 {
      %cst_10 = arith.constant 0.000000e+00 : f32
      %12 = vector.broadcast %cst_10 : f32 to vector<16x64xf32>
      %c0_11 = arith.constant 0 : index
      %c0_12 = arith.constant 0 : index
      %13 = vector.load %arg7[%c0_11, %c0_12] : memref<16x64xf32, #tpu.memory_space<vmem>>, vector<16x64xf32>
      tpu.vector_store %arg7[%c0_11, %c0_12], %12 {strides = array<i32>} : memref<16x64xf32, #tpu.memory_space<vmem>>, vector<16x64xf32>,
    } else {
    }
    %c0 = arith.constant 0 : index
    %c0_1 = arith.constant 0 : index
    %3 = vector.load %arg7[%c0, %c0_1] : memref<16x64xf32, #tpu.memory_space<vmem>>, vector<16x64xf32>
    %c0_2 = arith.constant 0 : index
    %c0_3 = arith.constant 0 : index
    %4 = vector.load %arg3[%c0_2, %c0_3] : memref<16x32xbf16, #tpu.memory_space<vmem>>, vector<16x32xbf16>
    %c0_4 = arith.constant 0 : index
    %c0_5 = arith.constant 0 : index
    %5 = vector.load %arg4[%c0_4, %c0_5] : memref<32x64xbf16, #tpu.memory_space<vmem>>, vector<32x64xbf16>
    %cst = arith.constant dense<0.000000e+00> : vector<16x64xf32>
    %6 = tpu.matmul %4, %5, %cst {dimension_numbers = #tpu.dot_dimension_numbers<[1], [0], [0], [1], [0, 0, 1, 1], [], []>} : vector<16x32xbf16>, vector<32x64xbf16>, vector<16x64xf32> -> vector<16x64xf32>
    %7 = arith.addf %3, %6 : vector<16x64xf32>
    %c0_6 = arith.constant 0 : index
    %c0_7 = arith.constant 0 : index
    %8 = vector.load %arg7[%c0_6, %c0_7] : memref<16x64xf32, #tpu.memory_space<vmem>>, vector<16x64xf32>
    tpu.vector_store %arg7[%c0_6, %c0_7], %7 {strides = array<i32>} : memref<16x64xf32, #tpu.memory_space<vmem>>, vector<16x64xf32>,
    %c0_i32_8 = arith.constant 0 : i32
    %9 = arith.cmpi eq, %arg2, %c0_i32_8 : i32
    %10 = arith.extui %9 : i1 to i32
    %c0_i32_9 = arith.constant 0 : i32
    %11 = arith.cmpi ne, %10, %c0_i32_9 : i32
    scf.if %11 {
      %c0_10 = arith.constant 0 : index
      %c0_11 = arith.constant 0 : index
      %12 = vector.load %arg7[%c0_10, %c0_11] : memref<16x64xf32, #tpu.memory_space<vmem>>, vector<16x64xf32>
      %c0_12 = arith.constant 0 : index
      %c0_13 = arith.constant 0 : index
      %13 = vector.load %arg5[%c0_12, %c0_13] : memref<1x64xf32, #tpu.memory_space<vmem>>, vector<1x64xf32>
      %14 = vector.broadcast %13 : vector<1x64xf32> to vector<16x64xf32>
      %15 = arith.addf %12, %14 : vector<16x64xf32>
      %16 = arith.truncf %15 : vector<16x64xf32> to vector<16x64xbf16>
      %c0_14 = arith.constant 0 : index
      %c0_15 = arith.constant 0 : index
      %17 = vector.load %arg6[%c0_14, %c0_15] : memref<16x64xbf16, #tpu.memory_space<vmem>>, vector<16x64xbf16>
      tpu.vector_store %arg6[%c0_14, %c0_15], %16 {strides = array<i32>} : memref<16x64xbf16, #tpu.memory_space<vmem>>, vector<16x64xbf16>,
    } else {
    }
    return
  }
  func.func @transform_0(%arg0: i32, %arg1: i32, %arg2: i32) -> (i32, i32) {
    %c0_i32 = arith.constant 0 : i32
    return %arg0, %arg2 : i32, i32
  }
  func.func @transform_1(%arg0: i32, %arg1: i32, %arg2: i32) -> (i32, i32) {
    %c0_i32 = arith.constant 0 : i32
    return %arg2, %arg1 : i32, i32
  }
  func.func @transform_2(%arg0: i32, %arg1: i32, %arg2: i32) -> (i32, i32) {
    %c0_i32 = arith.constant 0 : i32
    %c0_i32_0 = arith.constant 0 : i32
    return %c0_i32, %arg1 : i32, i32
  }
  func.func @transform_3(%arg0: i32, %arg1: i32, %arg2: i32) -> (i32, i32) {
    %c0_i32 = arith.constant 0 : i32
    return %arg0, %arg1 : i32, i32
  }
}

module attributes {stable_mosaic.version = 11 : i64} {
  func.func @_ffn_ln_kernel(%arg0: i32, %arg1: memref<16x64xbf16, #tpu.memory_space<vmem>>, %arg2: memref<64x64xbf16, #tpu.memory_space<vmem>>, %arg3: memref<1x64xf32, #tpu.memory_space<vmem>>, %arg4: memref<64x64xbf16, #tpu.memory_space<vmem>>, %arg5: memref<1x64xf32, #tpu.memory_space<vmem>>, %arg6: memref<1x64xf32, #tpu.memory_space<vmem>>, %arg7: memref<1x64xf32, #tpu.memory_space<vmem>>, %arg8: memref<16x64xbf16, #tpu.memory_space<vmem>>) attributes {dimension_semantics = [#tpu.dimension_semantics<parallel>], iteration_bounds = array<i64: 1>, scalar_prefetch = 0 : i64, scratch_operands = 0 : i64, tpu.core_type = #tpu.core_type<tc>, window_params = [{transform_indices = @transform_0, window_bounds = array<i64: 16, 64>}, {pipeline_mode = #tpu.pipeline_mode<synchronous>, transform_indices = @transform_1, window_bounds = array<i64: 64, 64>}, {pipeline_mode = #tpu.pipeline_mode<synchronous>, transform_indices = @transform_2, window_bounds = array<i64: 1, 64>}, {pipeline_mode = #tpu.pipeline_mode<synchronous>, transform_indices = @transform_3, window_bounds = array<i64: 64, 64>}, {pipeline_mode = #tpu.pipeline_mode<synchronous>, transform_indices = @transform_4, window_bounds = array<i64: 1, 64>}, {pipeline_mode = #tpu.pipeline_mode<synchronous>, transform_indices = @transform_5, window_bounds = array<i64: 1, 64>}, {pipeline_mode = #tpu.pipeline_mode<synchronous>, transform_indices = @transform_6, window_bounds = array<i64: 1, 64>}, {transform_indices = @transform_7, window_bounds = array<i64: 16, 64>}]} {
    %c0 = arith.constant 0 : index
    %c0_0 = arith.constant 0 : index
    %0 = vector.load %arg1[%c0, %c0_0] : memref<16x64xbf16, #tpu.memory_space<vmem>>, vector<16x64xbf16>
    %c0_1 = arith.constant 0 : index
    %c0_2 = arith.constant 0 : index
    %1 = vector.load %arg2[%c0_1, %c0_2] : memref<64x64xbf16, #tpu.memory_space<vmem>>, vector<64x64xbf16>
    %cst = arith.constant dense<0.000000e+00> : vector<16x64xf32>
    %2 = tpu.matmul %0, %1, %cst {dimension_numbers = #tpu.dot_dimension_numbers<[1], [0], [0], [1], [0, 0, 1, 1], [], []>} : vector<16x64xbf16>, vector<64x64xbf16>, vector<16x64xf32> -> vector<16x64xf32>
    %c0_3 = arith.constant 0 : index
    %c0_4 = arith.constant 0 : index
    %3 = vector.load %arg3[%c0_3, %c0_4] : memref<1x64xf32, #tpu.memory_space<vmem>>, vector<1x64xf32>
    %4 = vector.broadcast %3 : vector<1x64xf32> to vector<16x64xf32>
    %5 = arith.addf %2, %4 : vector<16x64xf32>
    %cst_5 = arith.constant 0.000000e+00 : f32
    %6 = vector.broadcast %cst_5 : f32 to vector<16x64xf32>
    %7 = arith.maximumf %5, %6 : vector<16x64xf32>
    %8 = arith.truncf %7 : vector<16x64xf32> to vector<16x64xbf16>
    %c0_6 = arith.constant 0 : index
    %c0_7 = arith.constant 0 : index
    %9 = vector.load %arg4[%c0_6, %c0_7] : memref<64x64xbf16, #tpu.memory_space<vmem>>, vector<64x64xbf16>
    %cst_8 = arith.constant dense<0.000000e+00> : vector<16x64xf32>
    %10 = tpu.matmul %8, %9, %cst_8 {dimension_numbers = #tpu.dot_dimension_numbers<[1], [0], [0], [1], [0, 0, 1, 1], [], []>} : vector<16x64xbf16>, vector<64x64xbf16>, vector<16x64xf32> -> vector<16x64xf32>
    %c0_9 = arith.constant 0 : index
    %c0_10 = arith.constant 0 : index
    %11 = vector.load %arg5[%c0_9, %c0_10] : memref<1x64xf32, #tpu.memory_space<vmem>>, vector<1x64xf32>
    %12 = vector.broadcast %11 : vector<1x64xf32> to vector<16x64xf32>
    %13 = arith.addf %10, %12 : vector<16x64xf32>
    %14 = arith.extf %0 : vector<16x64xbf16> to vector<16x64xf32>
    %15 = arith.addf %13, %14 : vector<16x64xf32>
    %cst_11 = arith.constant dense<0.000000e+00> : vector<16xf32>
    %16 = vector.multi_reduction <add>, %15, %cst_11 [1] : vector<16x64xf32> to vector<16xf32>
    %17 = vector.shape_cast %16 : vector<16xf32> to vector<16x1xf32>
    %cst_12 = arith.constant 6.400000e+01 : f32
    %18 = vector.broadcast %cst_12 : f32 to vector<16x1xf32>
    %19 = arith.divf %17, %18 : vector<16x1xf32>
    %20 = vector.broadcast %19 : vector<16x1xf32> to vector<16x64xf32>
    %21 = arith.subf %15, %20 : vector<16x64xf32>
    %22 = arith.mulf %21, %21 : vector<16x64xf32>
    %cst_13 = arith.constant dense<0.000000e+00> : vector<16xf32>
    %23 = vector.multi_reduction <add>, %22, %cst_13 [1] : vector<16x64xf32> to vector<16xf32>
    %24 = vector.shape_cast %23 : vector<16xf32> to vector<16x1xf32>
    %cst_14 = arith.constant 6.400000e+01 : f32
    %25 = vector.broadcast %cst_14 : f32 to vector<16x1xf32>
    %26 = arith.divf %24, %25 : vector<16x1xf32>
    %27 = vector.broadcast %19 : vector<16x1xf32> to vector<16x64xf32>
    %28 = arith.subf %15, %27 : vector<16x64xf32>
    %cst_15 = arith.constant 9.99999996E-13 : f32
    %29 = vector.broadcast %cst_15 : f32 to vector<16x1xf32>
    %30 = arith.addf %26, %29 : vector<16x1xf32>
    %31 = math.rsqrt %30 : vector<16x1xf32>
    %32 = vector.broadcast %31 : vector<16x1xf32> to vector<16x64xf32>
    %33 = arith.mulf %28, %32 : vector<16x64xf32>
    %c0_16 = arith.constant 0 : index
    %c0_17 = arith.constant 0 : index
    %34 = vector.load %arg6[%c0_16, %c0_17] : memref<1x64xf32, #tpu.memory_space<vmem>>, vector<1x64xf32>
    %35 = vector.broadcast %34 : vector<1x64xf32> to vector<16x64xf32>
    %36 = arith.mulf %33, %35 : vector<16x64xf32>
    %c0_18 = arith.constant 0 : index
    %c0_19 = arith.constant 0 : index
    %37 = vector.load %arg7[%c0_18, %c0_19] : memref<1x64xf32, #tpu.memory_space<vmem>>, vector<1x64xf32>
    %38 = vector.broadcast %37 : vector<1x64xf32> to vector<16x64xf32>
    %39 = arith.addf %36, %38 : vector<16x64xf32>
    %40 = arith.truncf %39 : vector<16x64xf32> to vector<16x64xbf16>
    %c0_20 = arith.constant 0 : index
    %c0_21 = arith.constant 0 : index
    %41 = vector.load %arg8[%c0_20, %c0_21] : memref<16x64xbf16, #tpu.memory_space<vmem>>, vector<16x64xbf16>
    tpu.vector_store %arg8[%c0_20, %c0_21], %40 {strides = array<i32>} : memref<16x64xbf16, #tpu.memory_space<vmem>>, vector<16x64xbf16>,
    return
  }
  func.func @transform_0(%arg0: i32) -> (i32, i32) {
    %c0_i32 = arith.constant 0 : i32
    %c0_i32_0 = arith.constant 0 : i32
    return %arg0, %c0_i32 : i32, i32
  }
  func.func @transform_1(%arg0: i32) -> (i32, i32) {
    %c0_i32 = arith.constant 0 : i32
    %c0_i32_0 = arith.constant 0 : i32
    %c0_i32_1 = arith.constant 0 : i32
    return %c0_i32, %c0_i32_0 : i32, i32
  }
  func.func @transform_2(%arg0: i32) -> (i32, i32) {
    %c0_i32 = arith.constant 0 : i32
    %c0_i32_0 = arith.constant 0 : i32
    %c0_i32_1 = arith.constant 0 : i32
    return %c0_i32, %c0_i32_0 : i32, i32
  }
  func.func @transform_3(%arg0: i32) -> (i32, i32) {
    %c0_i32 = arith.constant 0 : i32
    %c0_i32_0 = arith.constant 0 : i32
    %c0_i32_1 = arith.constant 0 : i32
    return %c0_i32, %c0_i32_0 : i32, i32
  }
  func.func @transform_4(%arg0: i32) -> (i32, i32) {
    %c0_i32 = arith.constant 0 : i32
    %c0_i32_0 = arith.constant 0 : i32
    %c0_i32_1 = arith.constant 0 : i32
    return %c0_i32, %c0_i32_0 : i32, i32
  }
  func.func @transform_5(%arg0: i32) -> (i32, i32) {
    %c0_i32 = arith.constant 0 : i32
    %c0_i32_0 = arith.constant 0 : i32
    %c0_i32_1 = arith.constant 0 : i32
    return %c0_i32, %c0_i32_0 : i32, i32
  }
  func.func @transform_6(%arg0: i32) -> (i32, i32) {
    %c0_i32 = arith.constant 0 : i32
    %c0_i32_0 = arith.constant 0 : i32
    %c0_i32_1 = arith.constant 0 : i32
    return %c0_i32, %c0_i32_0 : i32, i32
  }
  func.func @transform_7(%arg0: i32) -> (i32, i32) {
    %c0_i32 = arith.constant 0 : i32
    %c0_i32_0 = arith.constant 0 : i32
    return %arg0, %c0_i32 : i32, i32
  }
}

module attributes {stable_mosaic.version = 11 : i64} {
  func.func @_cross_attn_ln_kernel(%arg0: i32, %arg1: i32, %arg2: memref<1x8x64xbf16, #tpu.memory_space<vmem>>, %arg3: memref<1x64x32xbf16, #tpu.memory_space<vmem>>, %arg4: memref<1x32x64xbf16, #tpu.memory_space<vmem>>, %arg5: memref<1x8x1xf32, #tpu.memory_space<vmem>>, %arg6: memref<32x32xf32, #tpu.memory_space<vmem>>, %arg7: memref<64x64xbf16, #tpu.memory_space<vmem>>, %arg8: memref<1x64xf32, #tpu.memory_space<vmem>>, %arg9: memref<1x64xf32, #tpu.memory_space<vmem>>, %arg10: memref<1x64xf32, #tpu.memory_space<vmem>>, %arg11: memref<1x64xf32, #tpu.memory_space<vmem>>, %arg12: memref<1x8x64xbf16, #tpu.memory_space<vmem>>) attributes {dimension_semantics = [#tpu.dimension_semantics<parallel>, #tpu.dimension_semantics<parallel>], iteration_bounds = array<i64: 2, 1>, scalar_prefetch = 0 : i64, scratch_operands = 0 : i64, tpu.core_type = #tpu.core_type<tc>, window_params = [{transform_indices = @transform_0, window_bounds = array<i64: 1, 8, 64>}, {transform_indices = @transform_1, window_bounds = array<i64: 1, 64, 32>}, {transform_indices = @transform_2, window_bounds = array<i64: 1, 32, 64>}, {transform_indices = @transform_3, window_bounds = array<i64: 1, 8, 1>}, {pipeline_mode = #tpu.pipeline_mode<synchronous>, transform_indices = @transform_4, window_bounds = array<i64: 32, 32>}, {pipeline_mode = #tpu.pipeline_mode<synchronous>, transform_indices = @transform_5, window_bounds = array<i64: 64, 64>}, {pipeline_mode = #tpu.pipeline_mode<synchronous>, transform_indices = @transform_6, window_bounds = array<i64: 1, 64>}, {pipeline_mode = #tpu.pipeline_mode<synchronous>, transform_indices = @transform_7, window_bounds = array<i64: 1, 64>}, {pipeline_mode = #tpu.pipeline_mode<synchronous>, transform_indices = @transform_8, window_bounds = array<i64: 1, 64>}, {pipeline_mode = #tpu.pipeline_mode<synchronous>, transform_indices = @transform_9, window_bounds = array<i64: 1, 64>}, {transform_indices = @transform_10, window_bounds = array<i64: 1, 8, 64>}]} {
    %c0 = arith.constant 0 : index
    %c0_0 = arith.constant 0 : index
    %c0_1 = arith.constant 0 : index
    %0 = vector.load %arg2[%c0, %c0_0, %c0_1] : memref<1x8x64xbf16, #tpu.memory_space<vmem>>, vector<1x8x64xbf16>
    %1 = vector.shape_cast %0 : vector<1x8x64xbf16> to vector<8x64xbf16>
    %c0_2 = arith.constant 0 : index
    %c0_3 = arith.constant 0 : index
    %2 = vector.load %arg7[%c0_2, %c0_3] : memref<64x64xbf16, #tpu.memory_space<vmem>>, vector<64x64xbf16>
    %cst = arith.constant dense<0.000000e+00> : vector<8x64xf32>
    %3 = tpu.matmul %1, %2, %cst {dimension_numbers = #tpu.dot_dimension_numbers<[1], [0], [0], [1], [0, 0, 1, 1], [], []>} : vector<8x64xbf16>, vector<64x64xbf16>, vector<8x64xf32> -> vector<8x64xf32>
    %c0_4 = arith.constant 0 : index
    %c0_5 = arith.constant 0 : index
    %4 = vector.load %arg8[%c0_4, %c0_5] : memref<1x64xf32, #tpu.memory_space<vmem>>, vector<1x64xf32>
    %5 = vector.broadcast %4 : vector<1x64xf32> to vector<8x64xf32>
    %6 = arith.addf %3, %5 : vector<8x64xf32>
    %7 = arith.truncf %6 : vector<8x64xf32> to vector<8x64xbf16>
    %c0_6 = arith.constant 0 : index
    %c0_7 = arith.constant 0 : index
    %c0_8 = arith.constant 0 : index
    %8 = vector.load %arg3[%c0_6, %c0_7, %c0_8] : memref<1x64x32xbf16, #tpu.memory_space<vmem>>, vector<1x64x32xbf16>
    %9 = vector.shape_cast %8 : vector<1x64x32xbf16> to vector<64x32xbf16>
    %cst_9 = arith.constant dense<0.000000e+00> : vector<8x32xf32>
    %10 = tpu.matmul %7, %9, %cst_9 {dimension_numbers = #tpu.dot_dimension_numbers<[1], [0], [0], [1], [0, 0, 1, 1], [], []>} : vector<8x64xbf16>, vector<64x32xbf16>, vector<8x32xf32> -> vector<8x32xf32>
    %cst_10 = arith.constant 0.353553385 : f32
    %11 = vector.broadcast %cst_10 : f32 to vector<8x32xf32>
    %12 = arith.mulf %10, %11 : vector<8x32xf32>
    %c0_11 = arith.constant 0 : index
    %c0_12 = arith.constant 0 : index
    %c0_13 = arith.constant 0 : index
    %13 = vector.load %arg5[%c0_11, %c0_12, %c0_13] : memref<1x8x1xf32, #tpu.memory_space<vmem>>, vector<1x8x1xf32>
    %14 = vector.shape_cast %13 : vector<1x8x1xf32> to vector<8x1xf32>
    %cst_14 = arith.constant 0.000000e+00 : f32
    %15 = vector.broadcast %cst_14 : f32 to vector<8x1xf32>
    %16 = arith.cmpf oeq, %14, %15 : vector<8x1xf32>
    %cst_15 = arith.constant -1.000000e+04 : f32
    %17 = vector.shape_cast %16 : vector<8x1xi1> to vector<8x1xi1>
    %18 = vector.broadcast %17 : vector<8x1xi1> to vector<8x32xi1>
    %19 = vector.broadcast %cst_15 : f32 to vector<8x32xf32>
    %20 = arith.select %18, %19, %12 : vector<8x32xi1>, vector<8x32xf32>
    %cst_16 = arith.constant dense<0xFF800000> : vector<8xf32>
    %21 = vector.multi_reduction <maximumf>, %20, %cst_16 [1] : vector<8x32xf32> to vector<8xf32>
    %22 = vector.shape_cast %21 : vector<8xf32> to vector<8x1xf32>
    %23 = vector.broadcast %22 : vector<8x1xf32> to vector<8x32xf32>
    %24 = arith.subf %20, %23 : vector<8x32xf32>
    %25 = math.exp %24 : vector<8x32xf32>
    %c0_17 = arith.constant 0 : index
    %c0_18 = arith.constant 0 : index
    %26 = vector.load %arg6[%c0_17, %c0_18] : memref<32x32xf32, #tpu.memory_space<vmem>>, vector<32x32xf32>
    %cst_19 = arith.constant dense<0.000000e+00> : vector<8x32xf32>
    %27 = tpu.matmul %25, %26, %cst_19 {dimension_numbers = #tpu.dot_dimension_numbers<[1], [0], [0], [1], [0, 0, 1, 1], [], []>} : vector<8x32xf32>, vector<32x32xf32>, vector<8x32xf32> -> vector<8x32xf32>
    %28 = tpu.reciprocal %27 {approx = true} : vector<8x32xf32> -> vector<8x32xf32>
    %29 = arith.mulf %25, %28 : vector<8x32xf32>
    %30 = arith.truncf %29 : vector<8x32xf32> to vector<8x32xbf16>
    %c0_20 = arith.constant 0 : index
    %c0_21 = arith.constant 0 : index
    %c0_22 = arith.constant 0 : index
    %31 = vector.load %arg4[%c0_20, %c0_21, %c0_22] : memref<1x32x64xbf16, #tpu.memory_space<vmem>>, vector<1x32x64xbf16>
    %32 = vector.shape_cast %31 : vector<1x32x64xbf16> to vector<32x64xbf16>
    %cst_23 = arith.constant dense<0.000000e+00> : vector<8x64xf32>
    %33 = tpu.matmul %30, %32, %cst_23 {dimension_numbers = #tpu.dot_dimension_numbers<[1], [0], [0], [1], [0, 0, 1, 1], [], []>} : vector<8x32xbf16>, vector<32x64xbf16>, vector<8x64xf32> -> vector<8x64xf32>
    %c0_24 = arith.constant 0 : index
    %c0_25 = arith.constant 0 : index
    %34 = vector.load %arg9[%c0_24, %c0_25] : memref<1x64xf32, #tpu.memory_space<vmem>>, vector<1x64xf32>
    %35 = vector.broadcast %34 : vector<1x64xf32> to vector<8x64xf32>
    %36 = arith.addf %33, %35 : vector<8x64xf32>
    %37 = arith.extf %1 : vector<8x64xbf16> to vector<8x64xf32>
    %38 = arith.addf %36, %37 : vector<8x64xf32>
    %cst_26 = arith.constant dense<0.000000e+00> : vector<8xf32>
    %39 = vector.multi_reduction <add>, %38, %cst_26 [1] : vector<8x64xf32> to vector<8xf32>
    %40 = vector.shape_cast %39 : vector<8xf32> to vector<8x1xf32>
    %cst_27 = arith.constant 6.400000e+01 : f32
    %41 = vector.broadcast %cst_27 : f32 to vector<8x1xf32>
    %42 = arith.divf %40, %41 : vector<8x1xf32>
    %43 = vector.broadcast %42 : vector<8x1xf32> to vector<8x64xf32>
    %44 = arith.subf %38, %43 : vector<8x64xf32>
    %45 = arith.mulf %44, %44 : vector<8x64xf32>
    %cst_28 = arith.constant dense<0.000000e+00> : vector<8xf32>
    %46 = vector.multi_reduction <add>, %45, %cst_28 [1] : vector<8x64xf32> to vector<8xf32>
    %47 = vector.shape_cast %46 : vector<8xf32> to vector<8x1xf32>
    %cst_29 = arith.constant 6.400000e+01 : f32
    %48 = vector.broadcast %cst_29 : f32 to vector<8x1xf32>
    %49 = arith.divf %47, %48 : vector<8x1xf32>
    %50 = vector.broadcast %42 : vector<8x1xf32> to vector<8x64xf32>
    %51 = arith.subf %38, %50 : vector<8x64xf32>
    %cst_30 = arith.constant 9.99999996E-13 : f32
    %52 = vector.broadcast %cst_30 : f32 to vector<8x1xf32>
    %53 = arith.addf %49, %52 : vector<8x1xf32>
    %54 = math.rsqrt %53 : vector<8x1xf32>
    %55 = vector.broadcast %54 : vector<8x1xf32> to vector<8x64xf32>
    %56 = arith.mulf %51, %55 : vector<8x64xf32>
    %c0_31 = arith.constant 0 : index
    %c0_32 = arith.constant 0 : index
    %57 = vector.load %arg10[%c0_31, %c0_32] : memref<1x64xf32, #tpu.memory_space<vmem>>, vector<1x64xf32>
    %58 = vector.broadcast %57 : vector<1x64xf32> to vector<8x64xf32>
    %59 = arith.mulf %56, %58 : vector<8x64xf32>
    %c0_33 = arith.constant 0 : index
    %c0_34 = arith.constant 0 : index
    %60 = vector.load %arg11[%c0_33, %c0_34] : memref<1x64xf32, #tpu.memory_space<vmem>>, vector<1x64xf32>
    %61 = vector.broadcast %60 : vector<1x64xf32> to vector<8x64xf32>
    %62 = arith.addf %59, %61 : vector<8x64xf32>
    %63 = arith.truncf %62 : vector<8x64xf32> to vector<8x64xbf16>
    %c0_35 = arith.constant 0 : index
    %c0_36 = arith.constant 0 : index
    %c0_37 = arith.constant 0 : index
    %64 = vector.load %arg12[%c0_35, %c0_36, %c0_37] : memref<1x8x64xbf16, #tpu.memory_space<vmem>>, vector<1x8x64xbf16>
    %65 = vector.shape_cast %64 : vector<1x8x64xbf16> to vector<8x64xbf16>
    %66 = vector.shape_cast %63 : vector<8x64xbf16> to vector<1x8x64xbf16>
    tpu.vector_store %arg12[%c0_35, %c0_36, %c0_37], %66 {strides = array<i32>} : memref<1x8x64xbf16, #tpu.memory_space<vmem>>, vector<1x8x64xbf16>,
    return
  }
  func.func @transform_0(%arg0: i32, %arg1: i32) -> (i32, i32, i32) {
    %c0_i32 = arith.constant 0 : i32
    %c0_i32_0 = arith.constant 0 : i32
    return %arg0, %arg1, %c0_i32 : i32, i32, i32
  }
  func.func @transform_1(%arg0: i32, %arg1: i32) -> (i32, i32, i32) {
    %c0_i32 = arith.constant 0 : i32
    %c0_i32_0 = arith.constant 0 : i32
    %c0_i32_1 = arith.constant 0 : i32
    return %arg0, %c0_i32, %c0_i32_0 : i32, i32, i32
  }
  func.func @transform_2(%arg0: i32, %arg1: i32) -> (i32, i32, i32) {
    %c0_i32 = arith.constant 0 : i32
    %c0_i32_0 = arith.constant 0 : i32
    %c0_i32_1 = arith.constant 0 : i32
    return %arg0, %c0_i32, %c0_i32_0 : i32, i32, i32
  }
  func.func @transform_3(%arg0: i32, %arg1: i32) -> (i32, i32, i32) {
    %c0_i32 = arith.constant 0 : i32
    %c0_i32_0 = arith.constant 0 : i32
    return %arg0, %arg1, %c0_i32 : i32, i32, i32
  }
  func.func @transform_4(%arg0: i32, %arg1: i32) -> (i32, i32) {
    %c0_i32 = arith.constant 0 : i32
    %c0_i32_0 = arith.constant 0 : i32
    %c0_i32_1 = arith.constant 0 : i32
    return %c0_i32, %c0_i32_0 : i32, i32
  }
  func.func @transform_5(%arg0: i32, %arg1: i32) -> (i32, i32) {
    %c0_i32 = arith.constant 0 : i32
    %c0_i32_0 = arith.constant 0 : i32
    %c0_i32_1 = arith.constant 0 : i32
    return %c0_i32, %c0_i32_0 : i32, i32
  }
  func.func @transform_6(%arg0: i32, %arg1: i32) -> (i32, i32) {
    %c0_i32 = arith.constant 0 : i32
    %c0_i32_0 = arith.constant 0 : i32
    %c0_i32_1 = arith.constant 0 : i32
    return %c0_i32, %c0_i32_0 : i32, i32
  }
  func.func @transform_7(%arg0: i32, %arg1: i32) -> (i32, i32) {
    %c0_i32 = arith.constant 0 : i32
    %c0_i32_0 = arith.constant 0 : i32
    %c0_i32_1 = arith.constant 0 : i32
    return %c0_i32, %c0_i32_0 : i32, i32
  }
  func.func @transform_8(%arg0: i32, %arg1: i32) -> (i32, i32) {
    %c0_i32 = arith.constant 0 : i32
    %c0_i32_0 = arith.constant 0 : i32
    %c0_i32_1 = arith.constant 0 : i32
    return %c0_i32, %c0_i32_0 : i32, i32
  }
  func.func @transform_9(%arg0: i32, %arg1: i32) -> (i32, i32) {
    %c0_i32 = arith.constant 0 : i32
    %c0_i32_0 = arith.constant 0 : i32
    %c0_i32_1 = arith.constant 0 : i32
    return %c0_i32, %c0_i32_0 : i32, i32
  }
  func.func @transform_10(%arg0: i32, %arg1: i32) -> (i32, i32, i32) {
    %c0_i32 = arith.constant 0 : i32
    %c0_i32_0 = arith.constant 0 : i32
    return %arg0, %arg1, %c0_i32 : i32, i32, i32
  }
}

module attributes {stable_mosaic.version = 11 : i64} {
  func.func @_linear_kernel(%arg0: i32, %arg1: i32, %arg2: i32, %arg3: memref<2x192xbf16, #tpu.memory_space<vmem>>, %arg4: memref<192x64xbf16, #tpu.memory_space<vmem>>, %arg5: memref<1x64xf32, #tpu.memory_space<vmem>>, %arg6: memref<2x64xf32, #tpu.memory_space<vmem>>, %arg7: memref<2x64xf32, #tpu.memory_space<vmem>>) attributes {dimension_semantics = [#tpu.dimension_semantics<parallel>, #tpu.dimension_semantics<parallel>, #tpu.dimension_semantics<arbitrary>], iteration_bounds = array<i64: 1, 1, 1>, scalar_prefetch = 0 : i64, scratch_operands = 1 : i64, tpu.core_type = #tpu.core_type<tc>, window_params = [{transform_indices = @transform_0, window_bounds = array<i64: 2, 192>}, {transform_indices = @transform_1, window_bounds = array<i64: 192, 64>}, {transform_indices = @transform_2, window_bounds = array<i64: 1, 64>}, {transform_indices = @transform_3, window_bounds = array<i64: 2, 64>}]} {
    %c0_i32 = arith.constant 0 : i32
    %0 = arith.cmpi eq, %arg2, %c0_i32 : i32
    %1 = arith.extui %0 : i1 to i32
    %c0_i32_0 = arith.constant 0 : i32
    %2 = arith.cmpi ne, %1, %c0_i32_0 : i32
    scf.if %2 {
      %cst_10 = arith.constant 0.000000e+00 : f32
      %12 = vector.broadcast %cst_10 : f32 to vector<2x64xf32>
      %c0_11 = arith.constant 0 : index
      %c0_12 = arith.constant 0 : index
      %13 = vector.load %arg7[%c0_11, %c0_12] : memref<2x64xf32, #tpu.memory_space<vmem>>, vector<2x64xf32>
      tpu.vector_store %arg7[%c0_11, %c0_12], %12 {strides = array<i32>} : memref<2x64xf32, #tpu.memory_space<vmem>>, vector<2x64xf32>,
    } else {
    }
    %c0 = arith.constant 0 : index
    %c0_1 = arith.constant 0 : index
    %3 = vector.load %arg7[%c0, %c0_1] : memref<2x64xf32, #tpu.memory_space<vmem>>, vector<2x64xf32>
    %c0_2 = arith.constant 0 : index
    %c0_3 = arith.constant 0 : index
    %4 = vector.load %arg3[%c0_2, %c0_3] : memref<2x192xbf16, #tpu.memory_space<vmem>>, vector<2x192xbf16>
    %c0_4 = arith.constant 0 : index
    %c0_5 = arith.constant 0 : index
    %5 = vector.load %arg4[%c0_4, %c0_5] : memref<192x64xbf16, #tpu.memory_space<vmem>>, vector<192x64xbf16>
    %cst = arith.constant dense<0.000000e+00> : vector<2x64xf32>
    %6 = tpu.matmul %4, %5, %cst {dimension_numbers = #tpu.dot_dimension_numbers<[1], [0], [0], [1], [0, 0, 1, 1], [], []>} : vector<2x192xbf16>, vector<192x64xbf16>, vector<2x64xf32> -> vector<2x64xf32>
    %7 = arith.addf %3, %6 : vector<2x64xf32>
    %c0_6 = arith.constant 0 : index
    %c0_7 = arith.constant 0 : index
    %8 = vector.load %arg7[%c0_6, %c0_7] : memref<2x64xf32, #tpu.memory_space<vmem>>, vector<2x64xf32>
    tpu.vector_store %arg7[%c0_6, %c0_7], %7 {strides = array<i32>} : memref<2x64xf32, #tpu.memory_space<vmem>>, vector<2x64xf32>,
    %c0_i32_8 = arith.constant 0 : i32
    %9 = arith.cmpi eq, %arg2, %c0_i32_8 : i32
    %10 = arith.extui %9 : i1 to i32
    %c0_i32_9 = arith.constant 0 : i32
    %11 = arith.cmpi ne, %10, %c0_i32_9 : i32
    scf.if %11 {
      %c0_10 = arith.constant 0 : index
      %c0_11 = arith.constant 0 : index
      %12 = vector.load %arg7[%c0_10, %c0_11] : memref<2x64xf32, #tpu.memory_space<vmem>>, vector<2x64xf32>
      %c0_12 = arith.constant 0 : index
      %c0_13 = arith.constant 0 : index
      %13 = vector.load %arg5[%c0_12, %c0_13] : memref<1x64xf32, #tpu.memory_space<vmem>>, vector<1x64xf32>
      %14 = vector.broadcast %13 : vector<1x64xf32> to vector<2x64xf32>
      %15 = arith.addf %12, %14 : vector<2x64xf32>
      %c0_14 = arith.constant 0 : index
      %c0_15 = arith.constant 0 : index
      %16 = vector.load %arg6[%c0_14, %c0_15] : memref<2x64xf32, #tpu.memory_space<vmem>>, vector<2x64xf32>
      tpu.vector_store %arg6[%c0_14, %c0_15], %15 {strides = array<i32>} : memref<2x64xf32, #tpu.memory_space<vmem>>, vector<2x64xf32>,
    } else {
    }
    return
  }
  func.func @transform_0(%arg0: i32, %arg1: i32, %arg2: i32) -> (i32, i32) {
    %c0_i32 = arith.constant 0 : i32
    return %arg0, %arg2 : i32, i32
  }
  func.func @transform_1(%arg0: i32, %arg1: i32, %arg2: i32) -> (i32, i32) {
    %c0_i32 = arith.constant 0 : i32
    return %arg2, %arg1 : i32, i32
  }
  func.func @transform_2(%arg0: i32, %arg1: i32, %arg2: i32) -> (i32, i32) {
    %c0_i32 = arith.constant 0 : i32
    %c0_i32_0 = arith.constant 0 : i32
    return %c0_i32, %arg1 : i32, i32
  }
  func.func @transform_3(%arg0: i32, %arg1: i32, %arg2: i32) -> (i32, i32) {
    %c0_i32 = arith.constant 0 : i32
    return %arg0, %arg1 : i32, i32
  }
}

</mosaic_0001>

<llo_original>
// kernel: bert_entity_encoder_forward.8
$region0: #{bert_entity_encoder_forward.8}
  #allocation0 [shape = 'u32[]', space=smem, size = 0x4, offset = 0x4, fixed_abs, tag = 'smem constant byte address 0x4 - core index']
  #allocation1 [shape = 'u32[144,128]{1,0:T(1,128)}', space=vmem, size = 0x12000, scoped, tag = 'internal scratch']
  #allocation2 [shape = 'f32[8,64]{1,0:T(8,128)}', space=vmem, size = 0x1000, scoped, tag = 'scratch operand']
  %s0 = inlined_call_operand.vmem [shape: bf16[8,128], index: 0, kind: input, shape index: {}]
  %s1 = inlined_call_operand.vmem [shape: bf16[128,64], index: 1, kind: input, shape index: {}]
  %s2 = inlined_call_operand.vmem [shape: f32[1,64], index: 2, kind: input, shape index: {}]
  %s3 = inlined_call_operand.vmem [shape: bf16[8,64], index: 3, kind: output, shape index: {}]
  %s4 = sld [smem:[#allocation0]]
  $region30: #{bert_entity_encoder_forward.8} parent=0
    _
  %s6 = ssub.s32 1, %s4
  %s7 = scalar_select 0, %s6, %s4
  // Predicated region
  $region2: #{bert_entity_encoder_forward.8} parent=0 // pred_check
    _
  $region3: #{bert_entity_encoder_forward.8} parent=0 // pred_check_branch
    %9 = sbr.rel (0) target = $region5
  $region4: #{bert_entity_encoder_forward.8} parent=0 // pred_region
    _
  $region5: #{bert_entity_encoder_forward.8} parent=0 // pred_fallthru
    _
  // Predicated region
  $region6: #{bert_entity_encoder_forward.8} parent=0 // pred_check
    _
  $region7: #{bert_entity_encoder_forward.8} parent=0 // pred_check_branch
    %11 = sbr.rel (0) target = $region9
  $region8: #{bert_entity_encoder_forward.8} parent=0 // pred_region
    _
  $region9: #{bert_entity_encoder_forward.8} parent=0 // pred_fallthru
    _
  // Predicated region
  $region10: #{bert_entity_encoder_forward.8} parent=0 // pred_check
    _
  $region11: #{bert_entity_encoder_forward.8} parent=0 // pred_check_branch
    %13 = sbr.rel (0) target = $region13
  $region12: #{bert_entity_encoder_forward.8} parent=0 // pred_region
    _
  $region13: #{bert_entity_encoder_forward.8} parent=0 // pred_fallthru
    _
  %p15 = scmp.eq.s32.totalorder 0, 0
  // Predicated region
  $region14: #{bert_entity_encoder_forward.8} parent=0 // pred_check
    %p16 = pneg %p15
  $region15: #{bert_entity_encoder_forward.8} parent=0 // pred_check_branch
    %18 = sbr.rel (%p16) target = $region17
  $region16: #{bert_entity_encoder_forward.8} parent=0 // pred_region
    %vm19 = vcmask 523264
    %20 = vst.msk [vmem:[#allocation2] sm:$0xff] %vm19, 0.0
  $region17: #{bert_entity_encoder_forward.8} parent=0 // pred_fallthru
    _
  %v21 = vld [vmem:[#allocation2] sm:$0xff]
  %v22 = vld [vmem:[%s0] sm:$0xf]
  %v23 = vld [vmem:[%s1] sm:$0xf]
  %v24 = vld [vmem:[%s1 + $0x4] sm:$0xf]
  %v25 = vld [vmem:[%s1 + $0x8] sm:$0xf]
  %v26 = vld [vmem:[%s1 + $0xc] sm:$0xf]
  %v27 = vld [vmem:[%s1 + $0x10] sm:$0xf]
  %v28 = vld [vmem:[%s1 + $0x14] sm:$0xf]
  %v29 = vld [vmem:[%s1 + $0x18] sm:$0xf]
  %v30 = vld [vmem:[%s1 + $0x1c] sm:$0xf]
  %v31 = vld [vmem:[%s1 + $0x20] sm:$0xf]
  %v32 = vld [vmem:[%s1 + $0x24] sm:$0xf]
  %v33 = vld [vmem:[%s1 + $0x28] sm:$0xf]
  %v34 = vld [vmem:[%s1 + $0x2c] sm:$0xf]
  %v35 = vld [vmem:[%s1 + $0x30] sm:$0xf]
  %v36 = vld [vmem:[%s1 + $0x34] sm:$0xf]
  %v37 = vld [vmem:[%s1 + $0x38] sm:$0xf]
  %v38 = vld [vmem:[%s1 + $0x3c] sm:$0xf]
  %v55 = vunpack.c.l.b16 %v23
  %v56 = vunpack.c.l.b16 %v24
  %v57 = vunpack.c.l.b16 %v25
  %v58 = vunpack.c.l.b16 %v26
  %v59 = vunpack.c.l.b16 %v27
  %v60 = vunpack.c.l.b16 %v28
  %v61 = vunpack.c.l.b16 %v29
  %v62 = vunpack.c.l.b16 %v30
  %v63 = vunpack.c.l.b16 %v31
  %v64 = vunpack.c.l.b16 %v32
  %v65 = vunpack.c.l.b16 %v33
  %v66 = vunpack.c.l.b16 %v34
  %v67 = vunpack.c.l.b16 %v35
  %v68 = vunpack.c.l.b16 %v36
  %v69 = vunpack.c.l.b16 %v37
  %v70 = vunpack.c.l.b16 %v38
  %v71 = vpack.c.b16 %v56, %v55
  %v72 = vpack.c.b16 %v58, %v57
  %v73 = vpack.c.b16 %v60, %v59
  %v74 = vpack.c.b16 %v62, %v61
  %v75 = vpack.c.b16 %v64, %v63
  %v76 = vpack.c.b16 %v66, %v65
  %v77 = vpack.c.b16 %v68, %v67
  %v78 = vpack.c.b16 %v70, %v69
  %87 = vmatprep.subr.bf16.mxu0 0
  %88 = vmatpush1.bf16.msra.mxu0 %v78
  %89 = vmatprep.subr.bf16.mxu0 0
  %90 = vmatpush1.bf16.msra.mxu0 %v77
  %91 = vmatprep.subr.bf16.mxu0 0
  %92 = vmatpush1.bf16.msra.mxu0 %v76
  %93 = vmatprep.subr.bf16.mxu0 0
  %94 = vmatpush1.bf16.msra.mxu0 %v75
  %95 = vmatprep.subr.bf16.mxu0 0
  %96 = vmatpush1.bf16.msra.mxu0 %v74
  %97 = vmatprep.subr.bf16.mxu0 0
  %98 = vmatpush1.bf16.msra.mxu0 %v73
  %99 = vmatprep.subr.bf16.mxu0 0
  %100 = vmatpush1.bf16.msra.mxu0 %v72
  %101 = vmatprep.subr.bf16.mxu0 0
  %102 = vmatpush1.bf16.msra.mxu0 %v71
  %103 = vmatprep.subr.bf16.mxu0 0
  %104 = vmatpush2.bf16.msra.mxu0 0
  %105 = vmatprep.subr.bf16.mxu0 0
  %106 = vmatpush2.bf16.msra.mxu0 0
  %107 = vmatprep.subr.bf16.mxu0 0
  %108 = vmatpush2.bf16.msra.mxu0 0
  %109 = vmatprep.subr.bf16.mxu0 0
  %110 = vmatpush2.bf16.msra.mxu0 0
  %111 = vmatprep.subr.bf16.mxu0 0
  %112 = vmatpush2.bf16.msra.mxu0 0
  %113 = vmatprep.subr.bf16.mxu0 0
  %114 = vmatpush2.bf16.msra.mxu0 0
  %115 = vmatprep.subr.bf16.mxu0 0
  %116 = vmatpush2.bf16.msra.mxu0 0
  %117 = vmatprep.subr.bf16.mxu0 0
  %118 = vmatpush2.bf16.msra.mxu0 0
  %119 = vmatprep.mubr.bf16.mxu0 0
  %120 = vmatmul.mubr.bf16.gmra.mxu0 %v22
  %v121 = vpop.f32.mrf.mxu0
  %v122 = vadd.f32 0.0, %v121
  %v123 = vpop.f32.mrf.mxu0
  %v124 = vpop.f32.mrf.mxu0
  %v125 = vpop.f32.mrf.mxu0
  %126 = vdwg.mxu0
  %v127 = vadd.f32 %v21, %v122
  %vm128 = vcmask 523264
  %129 = vst.msk [vmem:[#allocation2] sm:$0xff] %vm128, %v127
  // Predicated region
  $region18: #{bert_entity_encoder_forward.8} parent=0 // pred_check
    %p130 = pneg %p15
  $region19: #{bert_entity_encoder_forward.8} parent=0 // pred_check_branch
    %132 = sbr.rel (%p130) target = $region21
  $region20: #{bert_entity_encoder_forward.8} parent=0 // pred_region
    %v133 = vld [vmem:[#allocation2] sm:$0xff]
    %v134 = vld [vmem:[%s2] sm:$0x1]
    %v136 = vlaneseq
    %v137 = vshrl.u32 %v136, 7
    %v138 = vsub.s32 0, %v137
    %v139 = vrot.slane %v134, %v138
    %v141 = vadd.f32 %v133, %v139
    %v142 = vpack.c.bf16 %v141, %v141
    %vm143 = vcmask 519168
    %144 = vst.msk [vmem:[%s3] sm:$0xf] %vm143, %v142
  $region21: #{bert_entity_encoder_forward.8} parent=0 // pred_fallthru
    _
  // Predicated region
  $region22: #{bert_entity_encoder_forward.8} parent=0 // pred_check
    _
  $region23: #{bert_entity_encoder_forward.8} parent=0 // pred_check_branch
    %146 = sbr.rel (0) target = $region25
  $region24: #{bert_entity_encoder_forward.8} parent=0 // pred_region
    _
  $region25: #{bert_entity_encoder_forward.8} parent=0 // pred_fallthru
    _
  // Predicated region
  $region26: #{bert_entity_encoder_forward.8} parent=0 // pred_check
    _
  $region27: #{bert_entity_encoder_forward.8} parent=0 // pred_check_branch
    %148 = sbr.rel (0) target = $region29
  $region28: #{bert_entity_encoder_forward.8} parent=0 // pred_region
    _
  $region29: #{bert_entity_encoder_forward.8} parent=0 // pred_fallthru
    _

// kernel: bert_entity_encoder_forward.9
$region0: #{bert_entity_encoder_forward.9}
  #allocation0 [shape = 'u32[]', space=smem, size = 0x4, offset = 0x4, fixed_abs, tag = 'smem constant byte address 0x4 - core index']
  #allocation1 [shape = 'u32[144,128]{1,0:T(1,128)}', space=vmem, size = 0x12000, scoped, tag = 'internal scratch']
  #allocation2 [shape = 'f32[8,64]{1,0:T(8,128)}', space=vmem, size = 0x1000, scoped, tag = 'scratch operand']
  %s0 = inlined_call_operand.vmem [shape: bf16[8,64], index: 0, kind: input, shape index: {}]
  %s1 = inlined_call_operand.vmem [shape: bf16[64,64], index: 1, kind: input, shape index: {}]
  %s2 = inlined_call_operand.vmem [shape: f32[1,64], index: 2, kind: input, shape index: {}]
  %s3 = inlined_call_operand.vmem [shape: bf16[8,64], index: 3, kind: output, shape index: {}]
  %s4 = sld [smem:[#allocation0]]
  $region30: #{bert_entity_encoder_forward.9} parent=0
    _
  %s6 = ssub.s32 1, %s4
  %s7 = scalar_select 0, %s6, %s4
  // Predicated region
  $region2: #{bert_entity_encoder_forward.9} parent=0 // pred_check
    _
  $region3: #{bert_entity_encoder_forward.9} parent=0 // pred_check_branch
    %9 = sbr.rel (0) target = $region5
  $region4: #{bert_entity_encoder_forward.9} parent=0 // pred_region
    _
  $region5: #{bert_entity_encoder_forward.9} parent=0 // pred_fallthru
    _
  // Predicated region
  $region6: #{bert_entity_encoder_forward.9} parent=0 // pred_check
    _
  $region7: #{bert_entity_encoder_forward.9} parent=0 // pred_check_branch
    %11 = sbr.rel (0) target = $region9
  $region8: #{bert_entity_encoder_forward.9} parent=0 // pred_region
    _
  $region9: #{bert_entity_encoder_forward.9} parent=0 // pred_fallthru
    _
  // Predicated region
  $region10: #{bert_entity_encoder_forward.9} parent=0 // pred_check
    _
  $region11: #{bert_entity_encoder_forward.9} parent=0 // pred_check_branch
    %13 = sbr.rel (0) target = $region13
  $region12: #{bert_entity_encoder_forward.9} parent=0 // pred_region
    _
  $region13: #{bert_entity_encoder_forward.9} parent=0 // pred_fallthru
    _
  %p15 = scmp.eq.s32.totalorder 0, 0
  // Predicated region
  $region14: #{bert_entity_encoder_forward.9} parent=0 // pred_check
    %p16 = pneg %p15
  $region15: #{bert_entity_encoder_forward.9} parent=0 // pred_check_branch
    %18 = sbr.rel (%p16) target = $region17
  $region16: #{bert_entity_encoder_forward.9} parent=0 // pred_region
    %vm19 = vcmask 523264
    %20 = vst.msk [vmem:[#allocation2] sm:$0xff] %vm19, 0.0
  $region17: #{bert_entity_encoder_forward.9} parent=0 // pred_fallthru
    _
  %v21 = vld [vmem:[#allocation2] sm:$0xff]
  %v22 = vld [vmem:[%s0] sm:$0xf]
  %v23 = vld [vmem:[%s1] sm:$0xf]
  %v24 = vld [vmem:[%s1 + $0x4] sm:$0xf]
  %v25 = vld [vmem:[%s1 + $0x8] sm:$0xf]
  %v26 = vld [vmem:[%s1 + $0xc] sm:$0xf]
  %v27 = vld [vmem:[%s1 + $0x10] sm:$0xf]
  %v28 = vld [vmem:[%s1 + $0x14] sm:$0xf]
  %v29 = vld [vmem:[%s1 + $0x18] sm:$0xf]
  %v30 = vld [vmem:[%s1 + $0x1c] sm:$0xf]
  %v39 = vunpack.c.l.b16 %v23
  %v40 = vunpack.c.l.b16 %v24
  %v41 = vunpack.c.l.b16 %v25
  %v42 = vunpack.c.l.b16 %v26
  %v43 = vunpack.c.l.b16 %v27
  %v44 = vunpack.c.l.b16 %v28
  %v45 = vunpack.c.l.b16 %v29
  %v46 = vunpack.c.l.b16 %v30
  %v47 = vpack.c.b16 %v40, %v39
  %v48 = vpack.c.b16 %v42, %v41
  %v49 = vpack.c.b16 %v44, %v43
  %v50 = vpack.c.b16 %v46, %v45
  %vm55 = vcmask 523264
  %v57 = vsel %vm55, %v22, 0
  %59 = vmatprep.subr.bf16.mxu0 0
  %60 = vmatpush1.bf16.msra.mxu0 0
  %61 = vmatprep.subr.bf16.mxu0 0
  %62 = vmatpush1.bf16.msra.mxu0 0
  %63 = vmatprep.subr.bf16.mxu0 0
  %64 = vmatpush1.bf16.msra.mxu0 0
  %65 = vmatprep.subr.bf16.mxu0 0
  %66 = vmatpush1.bf16.msra.mxu0 0
  %67 = vmatprep.subr.bf16.mxu0 0
  %68 = vmatpush1.bf16.msra.mxu0 %v50
  %69 = vmatprep.subr.bf16.mxu0 0
  %70 = vmatpush1.bf16.msra.mxu0 %v49
  %71 = vmatprep.subr.bf16.mxu0 0
  %72 = vmatpush1.bf16.msra.mxu0 %v48
  %73 = vmatprep.subr.bf16.mxu0 0
  %74 = vmatpush1.bf16.msra.mxu0 %v47
  %75 = vmatprep.subr.bf16.mxu0 0
  %76 = vmatpush2.bf16.msra.mxu0 0
  %77 = vmatprep.subr.bf16.mxu0 0
  %78 = vmatpush2.bf16.msra.mxu0 0
  %79 = vmatprep.subr.bf16.mxu0 0
  %80 = vmatpush2.bf16.msra.mxu0 0
  %81 = vmatprep.subr.bf16.mxu0 0
  %82 = vmatpush2.bf16.msra.mxu0 0
  %83 = vmatprep.subr.bf16.mxu0 0
  %84 = vmatpush2.bf16.msra.mxu0 0
  %85 = vmatprep.subr.bf16.mxu0 0
  %86 = vmatpush2.bf16.msra.mxu0 0
  %87 = vmatprep.subr.bf16.mxu0 0
  %88 = vmatpush2.bf16.msra.mxu0 0
  %89 = vmatprep.subr.bf16.mxu0 0
  %90 = vmatpush2.bf16.msra.mxu0 0
  %91 = vmatprep.mubr.bf16.mxu0 0
  %92 = vmatmul.mubr.bf16.gmra.mxu0 %v57
  %v93 = vpop.f32.mrf.mxu0
  %v94 = vadd.f32 0.0, %v93
  %v95 = vpop.f32.mrf.mxu0
  %v96 = vpop.f32.mrf.mxu0
  %v97 = vpop.f32.mrf.mxu0
  %98 = vdwg.mxu0
  %v99 = vadd.f32 %v21, %v94
  %100 = vst.msk [vmem:[#allocation2] sm:$0xff] %vm55, %v99
  // Predicated region
  $region18: #{bert_entity_encoder_forward.9} parent=0 // pred_check
    %p101 = pneg %p15
  $region19: #{bert_entity_encoder_forward.9} parent=0 // pred_check_branch
    %103 = sbr.rel (%p101) target = $region21
  $region20: #{bert_entity_encoder_forward.9} parent=0 // pred_region
    %v104 = vld [vmem:[#allocation2] sm:$0xff]
    %v105 = vld [vmem:[%s2] sm:$0x1]
    %v107 = vlaneseq
    %v108 = vshrl.u32 %v107, 7
    %v109 = vsub.s32 0, %v108
    %v110 = vrot.slane %v105, %v109
    %v112 = vadd.f32 %v104, %v110
    %v113 = vpack.c.bf16 %v112, %v112
    %vm114 = vcmask 519168
    %115 = vst.msk [vmem:[%s3] sm:$0xf] %vm114, %v113
  $region21: #{bert_entity_encoder_forward.9} parent=0 // pred_fallthru
    _
  // Predicated region
  $region22: #{bert_entity_encoder_forward.9} parent=0 // pred_check
    _
  $region23: #{bert_entity_encoder_forward.9} parent=0 // pred_check_branch
    %117 = sbr.rel (0) target = $region25
  $region24: #{bert_entity_encoder_forward.9} parent=0 // pred_region
    _
  $region25: #{bert_entity_encoder_forward.9} parent=0 // pred_fallthru
    _
  // Predicated region
  $region26: #{bert_entity_encoder_forward.9} parent=0 // pred_check
    _
  $region27: #{bert_entity_encoder_forward.9} parent=0 // pred_check_branch
    %119 = sbr.rel (0) target = $region29
  $region28: #{bert_entity_encoder_forward.9} parent=0 // pred_region
    _
  $region29: #{bert_entity_encoder_forward.9} parent=0 // pred_fallthru
    _

// kernel: bert_entity_encoder_forward.7
$region0: #{bert_entity_encoder_forward.7}
  #allocation0 [shape = 'u32[]', space=smem, size = 0x4, offset = 0x4, fixed_abs, tag = 'smem constant byte address 0x4 - core index']
  #allocation1 [shape = 'u32[144,128]{1,0:T(1,128)}', space=vmem, size = 0x12000, scoped, tag = 'internal scratch']
  #allocation2 [shape = 'f32[16,64]{1,0:T(8,128)}', space=vmem, size = 0x2000, scoped, tag = 'scratch operand']
  %s0 = inlined_call_operand.vmem [shape: bf16[16,32], index: 0, kind: input, shape index: {}]
  %s1 = inlined_call_operand.vmem [shape: bf16[32,64], index: 1, kind: input, shape index: {}]
  %s2 = inlined_call_operand.vmem [shape: f32[1,64], index: 2, kind: input, shape index: {}]
  %s3 = inlined_call_operand.vmem [shape: bf16[16,64], index: 3, kind: output, shape index: {}]
  %s4 = sld [smem:[#allocation0]]
  $region30: #{bert_entity_encoder_forward.7} parent=0
    _
  %s6 = ssub.s32 1, %s4
  %s7 = scalar_select 0, %s6, %s4
  // Predicated region
  $region2: #{bert_entity_encoder_forward.7} parent=0 // pred_check
    _
  $region3: #{bert_entity_encoder_forward.7} parent=0 // pred_check_branch
    %9 = sbr.rel (0) target = $region5
  $region4: #{bert_entity_encoder_forward.7} parent=0 // pred_region
    _
  $region5: #{bert_entity_encoder_forward.7} parent=0 // pred_fallthru
    _
  // Predicated region
  $region6: #{bert_entity_encoder_forward.7} parent=0 // pred_check
    _
  $region7: #{bert_entity_encoder_forward.7} parent=0 // pred_check_branch
    %11 = sbr.rel (0) target = $region9
  $region8: #{bert_entity_encoder_forward.7} parent=0 // pred_region
    _
  $region9: #{bert_entity_encoder_forward.7} parent=0 // pred_fallthru
    _
  // Predicated region
  $region10: #{bert_entity_encoder_forward.7} parent=0 // pred_check
    _
  $region11: #{bert_entity_encoder_forward.7} parent=0 // pred_check_branch
    %13 = sbr.rel (0) target = $region13
  $region12: #{bert_entity_encoder_forward.7} parent=0 // pred_region
    _
  $region13: #{bert_entity_encoder_forward.7} parent=0 // pred_fallthru
    _
  %p15 = scmp.eq.s32.totalorder 0, 0
  // Predicated region
  $region14: #{bert_entity_encoder_forward.7} parent=0 // pred_check
    %p16 = pneg %p15
  $region15: #{bert_entity_encoder_forward.7} parent=0 // pred_check_branch
    %18 = sbr.rel (%p16) target = $region17
  $region16: #{bert_entity_encoder_forward.7} parent=0 // pred_region
    %vm19 = vcmask 523264
    %20 = vst.msk [vmem:[#allocation2] sm:$0xff] %vm19, 0.0
    %21 = vst.msk [vmem:[#allocation2 + $0x8] sm:$0xff] %vm19, 0.0
  $region17: #{bert_entity_encoder_forward.7} parent=0 // pred_fallthru
    _
  %v22 = vld [vmem:[#allocation2] sm:$0xff]
  %v23 = vld [vmem:[#allocation2 + $0x8] sm:$0xff]
  %v24 = vld [vmem:[%s0] sm:$0xf]
  %v25 = vld [vmem:[%s0 + $0x4] sm:$0xf]
  %v26 = vld [vmem:[%s1] sm:$0xf]
  %v27 = vld [vmem:[%s1 + $0x4] sm:$0xf]
  %v28 = vld [vmem:[%s1 + $0x8] sm:$0xf]
  %v29 = vld [vmem:[%s1 + $0xc] sm:$0xf]
  %v32 = vunpack.c.l.b16 %v24
  %v33 = vunpack.c.l.b16 %v25
  %v34 = vpack.c.b16 %v33, %v32
  %v39 = vunpack.c.l.b16 %v26
  %v40 = vunpack.c.l.b16 %v27
  %v41 = vunpack.c.l.b16 %v28
  %v42 = vunpack.c.l.b16 %v29
  %v43 = vpack.c.b16 %v40, %v39
  %v44 = vpack.c.b16 %v42, %v41
  %vm47 = vcmask 261120
  %v49 = vsel %vm47, %v34, 0
  %51 = vmatprep.subr.bf16.mxu0 0
  %52 = vmatpush1.bf16.msra.mxu0 0
  %53 = vmatprep.subr.bf16.mxu0 0
  %54 = vmatpush1.bf16.msra.mxu0 0
  %55 = vmatprep.subr.bf16.mxu0 0
  %56 = vmatpush1.bf16.msra.mxu0 0
  %57 = vmatprep.subr.bf16.mxu0 0
  %58 = vmatpush1.bf16.msra.mxu0 0
  %59 = vmatprep.subr.bf16.mxu0 0
  %60 = vmatpush1.bf16.msra.mxu0 0
  %61 = vmatprep.subr.bf16.mxu0 0
  %62 = vmatpush1.bf16.msra.mxu0 0
  %63 = vmatprep.subr.bf16.mxu0 0
  %64 = vmatpush1.bf16.msra.mxu0 %v44
  %65 = vmatprep.subr.bf16.mxu0 0
  %66 = vmatpush1.bf16.msra.mxu0 %v43
  %67 = vmatprep.subr.bf16.mxu0 0
  %68 = vmatpush2.bf16.msra.mxu0 0
  %69 = vmatprep.subr.bf16.mxu0 0
  %70 = vmatpush2.bf16.msra.mxu0 0
  %71 = vmatprep.subr.bf16.mxu0 0
  %72 = vmatpush2.bf16.msra.mxu0 0
  %73 = vmatprep.subr.bf16.mxu0 0
  %74 = vmatpush2.bf16.msra.mxu0 0
  %75 = vmatprep.subr.bf16.mxu0 0
  %76 = vmatpush2.bf16.msra.mxu0 0
  %77 = vmatprep.subr.bf16.mxu0 0
  %78 = vmatpush2.bf16.msra.mxu0 0
  %79 = vmatprep.subr.bf16.mxu0 0
  %80 = vmatpush2.bf16.msra.mxu0 0
  %81 = vmatprep.subr.bf16.mxu0 0
  %82 = vmatpush2.bf16.msra.mxu0 0
  %83 = vmatprep.mubr.bf16.mxu0 0
  %84 = vmatmul.mubr.bf16.gmra.mxu0 %v49
  %v85 = vpop.f32.mrf.mxu0
  %v86 = vadd.f32 0.0, %v85
  %v87 = vpop.f32.mrf.mxu0
  %v88 = vpop.f32.mrf.mxu0
  %v89 = vadd.f32 0.0, %v88
  %v90 = vpop.f32.mrf.mxu0
  %91 = vdwg.mxu0
  %v92 = vadd.f32 %v22, %v86
  %v93 = vadd.f32 %v23, %v89
  %vm94 = vcmask 523264
  %95 = vst.msk [vmem:[#allocation2] sm:$0xff] %vm94, %v92
  %96 = vst.msk [vmem:[#allocation2 + $0x8] sm:$0xff] %vm94, %v93
  // Predicated region
  $region18: #{bert_entity_encoder_forward.7} parent=0 // pred_check
    %p97 = pneg %p15
  $region19: #{bert_entity_encoder_forward.7} parent=0 // pred_check_branch
    %99 = sbr.rel (%p97) target = $region21
  $region20: #{bert_entity_encoder_forward.7} parent=0 // pred_region
    %v100 = vld [vmem:[#allocation2] sm:$0xff]
    %v101 = vld [vmem:[#allocation2 + $0x8] sm:$0xff]
    %v102 = vld [vmem:[%s2] sm:$0x1]
    %v104 = vlaneseq
    %v105 = vshrl.u32 %v104, 7
    %v106 = vsub.s32 0, %v105
    %v107 = vrot.slane %v102, %v106
    %v109 = vadd.f32 %v100, %v107
    %v110 = vadd.f32 %v101, %v107
    %v111 = vpack.c.bf16 %v110, %v109
    %v113 = vunpack.c.l.b16 %v111
    %v114 = vunpack.c.h.b16 %v111
    %v115 = vpack.c.b16 %v113, %v113
    %v116 = vpack.c.b16 %v114, %v114
    %vm119 = vcmask 519168
    %120 = vst.msk [vmem:[%s3] sm:$0xf] %vm119, %v115
    %121 = vst.msk [vmem:[%s3 + $0x4] sm:$0xf] %vm119, %v116
  $region21: #{bert_entity_encoder_forward.7} parent=0 // pred_fallthru
    _
  // Predicated region
  $region22: #{bert_entity_encoder_forward.7} parent=0 // pred_check
    _
  $region23: #{bert_entity_encoder_forward.7} parent=0 // pred_check_branch
    %123 = sbr.rel (0) target = $region25
  $region24: #{bert_entity_encoder_forward.7} parent=0 // pred_region
    _
  $region25: #{bert_entity_encoder_forward.7} parent=0 // pred_fallthru
    _
  // Predicated region
  $region26: #{bert_entity_encoder_forward.7} parent=0 // pred_check
    _
  $region27: #{bert_entity_encoder_forward.7} parent=0 // pred_check_branch
    %125 = sbr.rel (0) target = $region29
  $region28: #{bert_entity_encoder_forward.7} parent=0 // pred_region
    _
  $region29: #{bert_entity_encoder_forward.7} parent=0 // pred_fallthru
    _

// kernel: bert_entity_encoder_forward.12
$region0: #{bert_entity_encoder_forward.12}
  #allocation0 [shape = 'u32[]', space=smem, size = 0x4, offset = 0x4, fixed_abs, tag = 'smem constant byte address 0x4 - core index']
  #allocation1 [shape = 'u32[144,128]{1,0:T(1,128)}', space=vmem, size = 0x12000, scoped, tag = 'internal scratch']
  %s0 = inlined_call_operand.vmem [shape: bf16[16,64], index: 0, kind: input, shape index: {}]
  %s1 = inlined_call_operand.vmem [shape: bf16[64,64], index: 1, kind: input, shape index: {}]
  %s2 = inlined_call_operand.vmem [shape: f32[1,64], index: 2, kind: input, shape index: {}]
  %s3 = inlined_call_operand.vmem [shape: bf16[64,64], index: 3, kind: input, shape index: {}]
  %s4 = inlined_call_operand.vmem [shape: f32[1,64], index: 4, kind: input, shape index: {}]
  %s5 = inlined_call_operand.vmem [shape: f32[1,64], index: 5, kind: input, shape index: {}]
  %s6 = inlined_call_operand.vmem [shape: f32[1,64], index: 6, kind: input, shape index: {}]
  %s7 = inlined_call_operand.vmem [shape: bf16[16,64], index: 7, kind: output, shape index: {}]
  %s8 = sld [smem:[#allocation0]]
  $region38: #{bert_entity_encoder_forward.12} parent=0
    _
  %s10 = ssub.s32 1, %s8
  %s11 = scalar_select 0, %s10, %s8
  // Predicated region
  $region2: #{bert_entity_encoder_forward.12} parent=0 // pred_check
    _
  $region3: #{bert_entity_encoder_forward.12} parent=0 // pred_check_branch
    %13 = sbr.rel (0) target = $region5
  $region4: #{bert_entity_encoder_forward.12} parent=0 // pred_region
    _
  $region5: #{bert_entity_encoder_forward.12} parent=0 // pred_fallthru
    _
  // Predicated region
  $region6: #{bert_entity_encoder_forward.12} parent=0 // pred_check
    _
  $region7: #{bert_entity_encoder_forward.12} parent=0 // pred_check_branch
    %15 = sbr.rel (0) target = $region9
  $region8: #{bert_entity_encoder_forward.12} parent=0 // pred_region
    _
  $region9: #{bert_entity_encoder_forward.12} parent=0 // pred_fallthru
    _
  // Predicated region
  $region10: #{bert_entity_encoder_forward.12} parent=0 // pred_check
    _
  $region11: #{bert_entity_encoder_forward.12} parent=0 // pred_check_branch
    %17 = sbr.rel (0) target = $region13
  $region12: #{bert_entity_encoder_forward.12} parent=0 // pred_region
    _
  $region13: #{bert_entity_encoder_forward.12} parent=0 // pred_fallthru
    _
  // Predicated region
  $region14: #{bert_entity_encoder_forward.12} parent=0 // pred_check
    _
  $region15: #{bert_entity_encoder_forward.12} parent=0 // pred_check_branch
    %19 = sbr.rel (0) target = $region17
  $region16: #{bert_entity_encoder_forward.12} parent=0 // pred_region
    _
  $region17: #{bert_entity_encoder_forward.12} parent=0 // pred_fallthru
    _
  // Predicated region
  $region18: #{bert_entity_encoder_forward.12} parent=0 // pred_check
    _
  $region19: #{bert_entity_encoder_forward.12} parent=0 // pred_check_branch
    %21 = sbr.rel (0) target = $region21
  $region20: #{bert_entity_encoder_forward.12} parent=0 // pred_region
    _
  $region21: #{bert_entity_encoder_forward.12} parent=0 // pred_fallthru
    _
  // Predicated region
  $region22: #{bert_entity_encoder_forward.12} parent=0 // pred_check
    _
  $region23: #{bert_entity_encoder_forward.12} parent=0 // pred_check_branch
    %23 = sbr.rel (0) target = $region25
  $region24: #{bert_entity_encoder_forward.12} parent=0 // pred_region
    _
  $region25: #{bert_entity_encoder_forward.12} parent=0 // pred_fallthru
    _
  // Predicated region
  $region26: #{bert_entity_encoder_forward.12} parent=0 // pred_check
    _
  $region27: #{bert_entity_encoder_forward.12} parent=0 // pred_check_branch
    %25 = sbr.rel (0) target = $region29
  $region28: #{bert_entity_encoder_forward.12} parent=0 // pred_region
    _
  $region29: #{bert_entity_encoder_forward.12} parent=0 // pred_fallthru
    _
  %v27 = vld [vmem:[%s0] sm:$0xf]
  %v28 = vld [vmem:[%s0 + $0x4] sm:$0xf]
  %v29 = vld [vmem:[%s1] sm:$0xf]
  %v30 = vld [vmem:[%s1 + $0x4] sm:$0xf]
  %v31 = vld [vmem:[%s1 + $0x8] sm:$0xf]
  %v32 = vld [vmem:[%s1 + $0xc] sm:$0xf]
  %v33 = vld [vmem:[%s1 + $0x10] sm:$0xf]
  %v34 = vld [vmem:[%s1 + $0x14] sm:$0xf]
  %v35 = vld [vmem:[%s1 + $0x18] sm:$0xf]
  %v36 = vld [vmem:[%s1 + $0x1c] sm:$0xf]
  %v37 = vld [vmem:[%s2] sm:$0x1]
  %v39 = vlaneseq
  %v40 = vshrl.u32 %v39, 7
  %v41 = vsub.s32 0, %v40
  %v42 = vrot.slane %v37, %v41
  %v46 = vunpack.c.l.b16 %v27
  %v47 = vunpack.c.l.b16 %v28
  %v48 = vpack.c.b16 %v47, %v46
  %v57 = vunpack.c.l.b16 %v29
  %v58 = vunpack.c.l.b16 %v30
  %v59 = vunpack.c.l.b16 %v31
  %v60 = vunpack.c.l.b16 %v32
  %v61 = vunpack.c.l.b16 %v33
  %v62 = vunpack.c.l.b16 %v34
  %v63 = vunpack.c.l.b16 %v35
  %v64 = vunpack.c.l.b16 %v36
  %v65 = vpack.c.b16 %v58, %v57
  %v66 = vpack.c.b16 %v60, %v59
  %v67 = vpack.c.b16 %v62, %v61
  %v68 = vpack.c.b16 %v64, %v63
  %vm73 = vcmask 523264
  %v75 = vsel %vm73, %v48, 0
  %77 = vmatprep.subr.bf16.mxu0 0
  %78 = vmatpush1.bf16.msra.mxu0 0
  %79 = vmatprep.subr.bf16.mxu0 0
  %80 = vmatpush1.bf16.msra.mxu0 0
  %81 = vmatprep.subr.bf16.mxu0 0
  %82 = vmatpush1.bf16.msra.mxu0 0
  %83 = vmatprep.subr.bf16.mxu0 0
  %84 = vmatpush1.bf16.msra.mxu0 0
  %85 = vmatprep.subr.bf16.mxu0 0
  %86 = vmatpush1.bf16.msra.mxu0 %v68
  %87 = vmatprep.subr.bf16.mxu0 0
  %88 = vmatpush1.bf16.msra.mxu0 %v67
  %89 = vmatprep.subr.bf16.mxu0 0
  %90 = vmatpush1.bf16.msra.mxu0 %v66
  %91 = vmatprep.subr.bf16.mxu0 0
  %92 = vmatpush1.bf16.msra.mxu0 %v65
  %93 = vmatprep.subr.bf16.mxu0 0
  %94 = vmatpush2.bf16.msra.mxu0 0
  %95 = vmatprep.subr.bf16.mxu0 0
  %96 = vmatpush2.bf16.msra.mxu0 0
  %97 = vmatprep.subr.bf16.mxu0 0
  %98 = vmatpush2.bf16.msra.mxu0 0
  %99 = vmatprep.subr.bf16.mxu0 0
  %100 = vmatpush2.bf16.msra.mxu0 0
  %101 = vmatprep.subr.bf16.mxu0 0
  %102 = vmatpush2.bf16.msra.mxu0 0
  %103 = vmatprep.subr.bf16.mxu0 0
  %104 = vmatpush2.bf16.msra.mxu0 0
  %105 = vmatprep.subr.bf16.mxu0 0
  %106 = vmatpush2.bf16.msra.mxu0 0
  %107 = vmatprep.subr.bf16.mxu0 0
  %108 = vmatpush2.bf16.msra.mxu0 0
  %109 = vmatprep.mubr.bf16.mxu0 0
  %110 = vmatmul.mubr.bf16.gmra.mxu0 %v75
  %v111 = vpop.f32.mrf.mxu0
  %v112 = vadd.f32 %v42, %v111
  %v113 = vpop.f32.mrf.mxu0
  %v114 = vpop.f32.mrf.mxu0
  %v115 = vadd.f32 %v42, %v114
  %v116 = vpop.f32.mrf.mxu0
  %117 = vdwg.mxu0
  %v118 = vmax.f32 %v112, 0.0
  %v119 = vmax.f32 %v115, 0.0
  %v120 = vpack.c.bf16 %v119, %v118
  %v121 = vld [vmem:[%s3] sm:$0xf]
  %v122 = vld [vmem:[%s3 + $0x4] sm:$0xf]
  %v123 = vld [vmem:[%s3 + $0x8] sm:$0xf]
  %v124 = vld [vmem:[%s3 + $0xc] sm:$0xf]
  %v125 = vld [vmem:[%s3 + $0x10] sm:$0xf]
  %v126 = vld [vmem:[%s3 + $0x14] sm:$0xf]
  %v127 = vld [vmem:[%s3 + $0x18] sm:$0xf]
  %v128 = vld [vmem:[%s3 + $0x1c] sm:$0xf]
  %v129 = vld [vmem:[%s4] sm:$0x1]
  %v131 = vlaneseq
  %v132 = vshrl.u32 %v131, 7
  %v133 = vsub.s32 0, %v132
  %v134 = vrot.slane %v129, %v133
  %v144 = vunpack.c.l.b16 %v121
  %v145 = vunpack.c.l.b16 %v122
  %v146 = vunpack.c.l.b16 %v123
  %v147 = vunpack.c.l.b16 %v124
  %v148 = vunpack.c.l.b16 %v125
  %v149 = vunpack.c.l.b16 %v126
  %v150 = vunpack.c.l.b16 %v127
  %v151 = vunpack.c.l.b16 %v128
  %v152 = vpack.c.b16 %v145, %v144
  %v153 = vpack.c.b16 %v147, %v146
  %v154 = vpack.c.b16 %v149, %v148
  %v155 = vpack.c.b16 %v151, %v150
  %v161 = vsel %vm73, %v120, 0
  %163 = vmatprep.subr.bf16.mxu0 0
  %164 = vmatpush1.bf16.msra.mxu0 0
  %165 = vmatprep.subr.bf16.mxu0 0
  %166 = vmatpush1.bf16.msra.mxu0 0
  %167 = vmatprep.subr.bf16.mxu0 0
  %168 = vmatpush1.bf16.msra.mxu0 0
  %169 = vmatprep.subr.bf16.mxu0 0
  %170 = vmatpush1.bf16.msra.mxu0 0
  %171 = vmatprep.subr.bf16.mxu0 0
  %172 = vmatpush1.bf16.msra.mxu0 %v155
  %173 = vmatprep.subr.bf16.mxu0 0
  %174 = vmatpush1.bf16.msra.mxu0 %v154
  %175 = vmatprep.subr.bf16.mxu0 0
  %176 = vmatpush1.bf16.msra.mxu0 %v153
  %177 = vmatprep.subr.bf16.mxu0 0
  %178 = vmatpush1.bf16.msra.mxu0 %v152
  %179 = vmatprep.subr.bf16.mxu0 0
  %180 = vmatpush2.bf16.msra.mxu0 0
  %181 = vmatprep.subr.bf16.mxu0 0
  %182 = vmatpush2.bf16.msra.mxu0 0
  %183 = vmatprep.subr.bf16.mxu0 0
  %184 = vmatpush2.bf16.msra.mxu0 0
  %185 = vmatprep.subr.bf16.mxu0 0
  %186 = vmatpush2.bf16.msra.mxu0 0
  %187 = vmatprep.subr.bf16.mxu0 0
  %188 = vmatpush2.bf16.msra.mxu0 0
  %189 = vmatprep.subr.bf16.mxu0 0
  %190 = vmatpush2.bf16.msra.mxu0 0
  %191 = vmatprep.subr.bf16.mxu0 0
  %192 = vmatpush2.bf16.msra.mxu0 0
  %193 = vmatprep.subr.bf16.mxu0 0
  %194 = vmatpush2.bf16.msra.mxu0 0
  %195 = vmatprep.mubr.bf16.mxu0 0
  %196 = vmatmul.mubr.bf16.gmra.mxu0 %v161
  %v197 = vpop.f32.mrf.mxu0
  %v198 = vadd.f32 %v134, %v197
  %v199 = vpop.f32.mrf.mxu0
  %v200 = vpop.f32.mrf.mxu0
  %v201 = vadd.f32 %v134, %v200
  %v202 = vpop.f32.mrf.mxu0
  %203 = vdwg.mxu0
  %v204 = vunpack.c.l.bf16 %v27
  %v205 = vunpack.c.l.bf16 %v28
  %v206 = vadd.f32 %v198, %v204
  %v207 = vadd.f32 %v201, %v205
  %v208 = vsel %vm73, %v206, 0.0
  %209 = vadd.xlane.f32.xlu0 %v208
  %v210 = vpop.xlane.xlu0 %209
  %v211 = vsel %vm73, %v207, 0.0
  %212 = vadd.xlane.f32.xlu0 %v211
  %v213 = vpop.xlane.xlu0 %212
  %v214 = vrcp.pop 64.0
  %v215 = vmul.f32 %v210, %v214
  %v216 = vmul.f32 %v213, %v214
  %v217 = vsub.f32 %v206, %v215
  %v218 = vsub.f32 %v207, %v216
  %v219 = vmul.f32 %v217, %v217
  %v220 = vmul.f32 %v218, %v218
  %v221 = vsel %vm73, %v219, 0.0
  %222 = vadd.xlane.f32.xlu0 %v221
  %v223 = vpop.xlane.xlu0 %222
  %v224 = vsel %vm73, %v220, 0.0
  %225 = vadd.xlane.f32.xlu0 %v224
  %v226 = vpop.xlane.xlu0 %225
  %v227 = vmul.f32 %v223, %v214
  %v228 = vmul.f32 %v226, %v214
  %v229 = vadd.f32 %v227, 1e-12
  %v230 = vadd.f32 %v228, 1e-12
  %v231 = vrsqrt.pop %v229
  %v232 = vrsqrt.pop %v230
  %v233 = vmul.f32 %v217, %v231
  %v234 = vmul.f32 %v218, %v232
  %v235 = vld [vmem:[%s5] sm:$0x1]
  %v237 = vlaneseq
  %v238 = vshrl.u32 %v237, 7
  %v239 = vsub.s32 0, %v238
  %v240 = vrot.slane %v235, %v239
  %v242 = vmul.f32 %v233, %v240
  %v243 = vmul.f32 %v234, %v240
  %v244 = vld [vmem:[%s6] sm:$0x1]
  %v246 = vlaneseq
  %v247 = vshrl.u32 %v246, 7
  %v248 = vsub.s32 0, %v247
  %v249 = vrot.slane %v244, %v248
  %v251 = vadd.f32 %v242, %v249
  %v252 = vadd.f32 %v243, %v249
  %v253 = vpack.c.bf16 %v252, %v251
  %v255 = vunpack.c.l.b16 %v253
  %v256 = vunpack.c.h.b16 %v253
  %v257 = vpack.c.b16 %v255, %v255
  %v258 = vpack.c.b16 %v256, %v256
  %vm261 = vcmask 519168
  %262 = vst.msk [vmem:[%s7] sm:$0xf] %vm261, %v257
  %263 = vst.msk [vmem:[%s7 + $0x4] sm:$0xf] %vm261, %v258
  // Predicated region
  $region30: #{bert_entity_encoder_forward.12} parent=0 // pred_check
    _
  $region31: #{bert_entity_encoder_forward.12} parent=0 // pred_check_branch
    %265 = sbr.rel (0) target = $region33
  $region32: #{bert_entity_encoder_forward.12} parent=0 // pred_region
    _
  $region33: #{bert_entity_encoder_forward.12} parent=0 // pred_fallthru
    _
  // Predicated region
  $region34: #{bert_entity_encoder_forward.12} parent=0 // pred_check
    _
  $region35: #{bert_entity_encoder_forward.12} parent=0 // pred_check_branch
    %267 = sbr.rel (0) target = $region37
  $region36: #{bert_entity_encoder_forward.12} parent=0 // pred_region
    _
  $region37: #{bert_entity_encoder_forward.12} parent=0 // pred_fallthru
    _

// kernel: bert_entity_encoder_forward.11
$region0: #{bert_entity_encoder_forward.11}
  #allocation0 [shape = 'u32[]', space=smem, size = 0x4, offset = 0x4, fixed_abs, tag = 'smem constant byte address 0x4 - core index']
  #allocation1 [shape = 'u32[144,128]{1,0:T(1,128)}', space=vmem, size = 0x12000, scoped, tag = 'internal scratch']
  %s0 = inlined_call_operand.vmem [shape: bf16[2,8,64], index: 0, kind: input, shape index: {}]
  %s1 = inlined_call_operand.vmem [shape: bf16[2,64,32], index: 1, kind: input, shape index: {}]
  %s2 = inlined_call_operand.vmem [shape: bf16[2,32,64], index: 2, kind: input, shape index: {}]
  %s3 = inlined_call_operand.vmem [shape: f32[2,8,1], index: 3, kind: input, shape index: {}]
  %s4 = inlined_call_operand.vmem [shape: f32[32,32], index: 4, kind: input, shape index: {}]
  %s5 = inlined_call_operand.vmem [shape: bf16[64,64], index: 5, kind: input, shape index: {}]
  %s6 = inlined_call_operand.vmem [shape: f32[1,64], index: 6, kind: input, shape index: {}]
  %s7 = inlined_call_operand.vmem [shape: f32[1,64], index: 7, kind: input, shape index: {}]
  %s8 = inlined_call_operand.vmem [shape: f32[1,64], index: 8, kind: input, shape index: {}]
  %s9 = inlined_call_operand.vmem [shape: f32[1,64], index: 9, kind: input, shape index: {}]
  %s10 = inlined_call_operand.vmem [shape: bf16[2,8,64], index: 10, kind: output, shape index: {}]
  %s11 = sld [smem:[#allocation0]]
  $region73: #{bert_entity_encoder_forward.11} parent=0
    _
  %s13 = ssub.s32 1, %s11
  %s14 = scalar_select 0, %s13, %s11
  loop: start=0, step=1, limit=4
  $region2: #{bert_entity_encoder_forward.11} parent=0 // loop_pre_header
    _
  $region3: #{bert_entity_encoder_forward.11} parent=0 // loop_header
    %s16 = sphi 0, %s20
    %p17 = scmp.ge.s32.totalorder %s16, 4
    %s23 = sphi 0, %s35
    %s24 = sphi 0, %s31
    %s25 = sphi 0, %s23
    %s26 = sphi 0, %s24
    %s27 = sphi 0, %s25
    %s28 = sphi 0, %s26
    %s40 = sphi 0, %s42
    %s43 = sphi 0, %s40
    %s44 = sphi 0, %s43
    %s60 = sphi 0, %s44
    %s66 = sphi 0, %s68
    %s69 = sphi 0, %s66
    %s70 = sphi 0, %s69
    %s86 = sphi 0, %s70
    %s92 = sphi 0, %s94
    %s95 = sphi 0, %s92
    %s96 = sphi 0, %s95
    %s112 = sphi 0, %s96
    %s120 = sphi 0, %s122
    %s123 = sphi 0, %s120
    %s124 = sphi 0, %s123
    %s140 = sphi 0, %s124
    %s144 = sphi 0, %s144
    %s146 = sphi 0, %s144
    %s147 = sphi 0, %s146
    %s161 = sphi 0, %s147
    %s165 = sphi 0, %s165
    %s167 = sphi 0, %s165
    %s168 = sphi 0, %s167
    %s182 = sphi 0, %s168
    %s186 = sphi 0, %s186
    %s188 = sphi 0, %s186
    %s189 = sphi 0, %s188
    %s203 = sphi 0, %s189
    %s207 = sphi 0, %s207
    %s209 = sphi 0, %s207
    %s210 = sphi 0, %s209
    %s224 = sphi 0, %s210
    %s228 = sphi 0, %s228
    %s230 = sphi 0, %s228
    %s231 = sphi 0, %s230
    %s245 = sphi 0, %s231
    %s249 = sphi 0, %s249
    %s251 = sphi 0, %s249
    %s252 = sphi 0, %s251
    %s266 = sphi 0, %s252
    %s274 = sphi 0, %s276
    %s277 = sphi 0, %s274
    %s278 = sphi 0, %s277
    %s294 = sphi 0, %s278
  $region4: #{bert_entity_encoder_forward.11} parent=0 // loop_header_branch
    %19 = sbr.rel (%p17) target = $region8
  $region5: #{bert_entity_encoder_forward.11} parent=0 // loop_body
    %s21 = ssub.s32 %s16, 1
    %s22 = ssub.s32 %s16, 2
    %s29 = sadd.s32 1, %s24
    %p30 = scmp.ge.s32.totalorder %s29, 1
    %s31 = scalar_select %p30, 0, %s29
    %s32 = sadd.s32 1, %s23
    %s33 = scalar_select %p30, %s32, %s23
    %p34 = scmp.ge.s32.totalorder %s33, 2
    %s35 = scalar_select %p34, 0, %s33
    %s36 = ssub.s32 %s23, %s35
    %s37 = ssub.s32 %s24, %s31
    %s38 = sor.u32 %s36, %s37
    %p39 = scmp.eq.s32.totalorder %s38, 0
    %s41 = sadd.s32 %s40, 1
    %s42 = scalar_select %p39, %s40, %s41
    %p45 = pneg %p39
    %p46 = scmp.eq.s32.totalorder %s16, 1
    %p47 = por %p45, %p46
    %p48 = scmp.ne.s32.totalorder %s40, %s43
    %p49 = scmp.eq.s32.totalorder %s16, 0
    %p50 = por %p48, %p49
    %p51 = scmp.ne.s32.totalorder %s40, %s43
    %p52 = scmp.eq.s32.totalorder %s21, 1
    %p53 = por %p51, %p52
    %p54 = scmp.ne.s32.totalorder %s43, %s44
    %p55 = scmp.eq.s32.totalorder %s21, 0
    %p56 = por %p54, %p55
    %p57 = scmp.ne.s32.totalorder %s43, %s44
    %p58 = scmp.eq.s32.totalorder %s22, 1
    %p59 = por %p57, %p58
    %p61 = scmp.ne.s32.totalorder %s44, %s60
    %p62 = scmp.eq.s32.totalorder %s22, 0
    %p63 = por %p61, %p62
    %s64 = ssub.s32 %s23, %s35
    %p65 = scmp.eq.s32.totalorder %s64, 0
    %s67 = sadd.s32 %s66, 1
    %s68 = scalar_select %p65, %s66, %s67
    %p71 = pneg %p65
    %p72 = scmp.eq.s32.totalorder %s16, 1
    %p73 = por %p71, %p72
    %p74 = scmp.ne.s32.totalorder %s66, %s69
    %p75 = scmp.eq.s32.totalorder %s16, 0
    %p76 = por %p74, %p75
    %p77 = scmp.ne.s32.totalorder %s66, %s69
    %p78 = scmp.eq.s32.totalorder %s21, 1
    %p79 = por %p77, %p78
    %p80 = scmp.ne.s32.totalorder %s69, %s70
    %p81 = scmp.eq.s32.totalorder %s21, 0
    %p82 = por %p80, %p81
    %p83 = scmp.ne.s32.totalorder %s69, %s70
    %p84 = scmp.eq.s32.totalorder %s22, 1
    %p85 = por %p83, %p84
    %p87 = scmp.ne.s32.totalorder %s70, %s86
    %p88 = scmp.eq.s32.totalorder %s22, 0
    %p89 = por %p87, %p88
    %s90 = ssub.s32 %s23, %s35
    %p91 = scmp.eq.s32.totalorder %s90, 0
    %s93 = sadd.s32 %s92, 1
    %s94 = scalar_select %p91, %s92, %s93
    %p97 = pneg %p91
    %p98 = scmp.eq.s32.totalorder %s16, 1
    %p99 = por %p97, %p98
    %p100 = scmp.ne.s32.totalorder %s92, %s95
    %p101 = scmp.eq.s32.totalorder %s16, 0
    %p102 = por %p100, %p101
    %p103 = scmp.ne.s32.totalorder %s92, %s95
    %p104 = scmp.eq.s32.totalorder %s21, 1
    %p105 = por %p103, %p104
    %p106 = scmp.ne.s32.totalorder %s95, %s96
    %p107 = scmp.eq.s32.totalorder %s21, 0
    %p108 = por %p106, %p107
    %p109 = scmp.ne.s32.totalorder %s95, %s96
    %p110 = scmp.eq.s32.totalorder %s22, 1
    %p111 = por %p109, %p110
    %p113 = scmp.ne.s32.totalorder %s96, %s112
    %p114 = scmp.eq.s32.totalorder %s22, 0
    %p115 = por %p113, %p114
    %s116 = ssub.s32 %s23, %s35
    %s117 = ssub.s32 %s24, %s31
    %s118 = sor.u32 %s116, %s117
    %p119 = scmp.eq.s32.totalorder %s118, 0
    %s121 = sadd.s32 %s120, 1
    %s122 = scalar_select %p119, %s120, %s121
    %p125 = pneg %p119
    %p126 = scmp.eq.s32.totalorder %s16, 1
    %p127 = por %p125, %p126
    %p128 = scmp.ne.s32.totalorder %s120, %s123
    %p129 = scmp.eq.s32.totalorder %s16, 0
    %p130 = por %p128, %p129
    %p131 = scmp.ne.s32.totalorder %s120, %s123
    %p132 = scmp.eq.s32.totalorder %s21, 1
    %p133 = por %p131, %p132
    %p134 = scmp.ne.s32.totalorder %s123, %s124
    %p135 = scmp.eq.s32.totalorder %s21, 0
    %p136 = por %p134, %p135
    %p137 = scmp.ne.s32.totalorder %s123, %s124
    %p138 = scmp.eq.s32.totalorder %s22, 1
    %p139 = por %p137, %p138
    %p141 = scmp.ne.s32.totalorder %s124, %s140
    %p142 = scmp.eq.s32.totalorder %s22, 0
    %p143 = por %p141, %p142
    %s145 = sadd.s32 %s144, 1
    %p148 = scmp.eq.s32.totalorder %s16, 1
    %p149 = scmp.ne.s32.totalorder %s144, %s146
    %p150 = scmp.eq.s32.totalorder %s16, 0
    %p151 = por %p149, %p150
    %p152 = scmp.ne.s32.totalorder %s144, %s146
    %p153 = scmp.eq.s32.totalorder %s21, 1
    %p154 = por %p152, %p153
    %p155 = scmp.ne.s32.totalorder %s146, %s147
    %p156 = scmp.eq.s32.totalorder %s21, 0
    %p157 = por %p155, %p156
    %p158 = scmp.ne.s32.totalorder %s146, %s147
    %p159 = scmp.eq.s32.totalorder %s22, 1
    %p160 = por %p158, %p159
    %p162 = scmp.ne.s32.totalorder %s147, %s161
    %p163 = scmp.eq.s32.totalorder %s22, 0
    %p164 = por %p162, %p163
    %s166 = sadd.s32 %s165, 1
    %p169 = scmp.eq.s32.totalorder %s16, 1
    %p170 = scmp.ne.s32.totalorder %s165, %s167
    %p171 = scmp.eq.s32.totalorder %s16, 0
    %p172 = por %p170, %p171
    %p173 = scmp.ne.s32.totalorder %s165, %s167
    %p174 = scmp.eq.s32.totalorder %s21, 1
    %p175 = por %p173, %p174
    %p176 = scmp.ne.s32.totalorder %s167, %s168
    %p177 = scmp.eq.s32.totalorder %s21, 0
    %p178 = por %p176, %p177
    %p179 = scmp.ne.s32.totalorder %s167, %s168
    %p180 = scmp.eq.s32.totalorder %s22, 1
    %p181 = por %p179, %p180
    %p183 = scmp.ne.s32.totalorder %s168, %s182
    %p184 = scmp.eq.s32.totalorder %s22, 0
    %p185 = por %p183, %p184
    %s187 = sadd.s32 %s186, 1
    %p190 = scmp.eq.s32.totalorder %s16, 1
    %p191 = scmp.ne.s32.totalorder %s186, %s188
    %p192 = scmp.eq.s32.totalorder %s16, 0
    %p193 = por %p191, %p192
    %p194 = scmp.ne.s32.totalorder %s186, %s188
    %p195 = scmp.eq.s32.totalorder %s21, 1
    %p196 = por %p194, %p195
    %p197 = scmp.ne.s32.totalorder %s188, %s189
    %p198 = scmp.eq.s32.totalorder %s21, 0
    %p199 = por %p197, %p198
    %p200 = scmp.ne.s32.totalorder %s188, %s189
    %p201 = scmp.eq.s32.totalorder %s22, 1
    %p202 = por %p200, %p201
    %p204 = scmp.ne.s32.totalorder %s189, %s203
    %p205 = scmp.eq.s32.totalorder %s22, 0
    %p206 = por %p204, %p205
    %s208 = sadd.s32 %s207, 1
    %p211 = scmp.eq.s32.totalorder %s16, 1
    %p212 = scmp.ne.s32.totalorder %s207, %s209
    %p213 = scmp.eq.s32.totalorder %s16, 0
    %p214 = por %p212, %p213
    %p215 = scmp.ne.s32.totalorder %s207, %s209
    %p216 = scmp.eq.s32.totalorder %s21, 1
    %p217 = por %p215, %p216
    %p218 = scmp.ne.s32.totalorder %s209, %s210
    %p219 = scmp.eq.s32.totalorder %s21, 0
    %p220 = por %p218, %p219
    %p221 = scmp.ne.s32.totalorder %s209, %s210
    %p222 = scmp.eq.s32.totalorder %s22, 1
    %p223 = por %p221, %p222
    %p225 = scmp.ne.s32.totalorder %s210, %s224
    %p226 = scmp.eq.s32.totalorder %s22, 0
    %p227 = por %p225, %p226
    %s229 = sadd.s32 %s228, 1
    %p232 = scmp.eq.s32.totalorder %s16, 1
    %p233 = scmp.ne.s32.totalorder %s228, %s230
    %p234 = scmp.eq.s32.totalorder %s16, 0
    %p235 = por %p233, %p234
    %p236 = scmp.ne.s32.totalorder %s228, %s230
    %p237 = scmp.eq.s32.totalorder %s21, 1
    %p238 = por %p236, %p237
    %p239 = scmp.ne.s32.totalorder %s230, %s231
    %p240 = scmp.eq.s32.totalorder %s21, 0
    %p241 = por %p239, %p240
    %p242 = scmp.ne.s32.totalorder %s230, %s231
    %p243 = scmp.eq.s32.totalorder %s22, 1
    %p244 = por %p242, %p243
    %p246 = scmp.ne.s32.totalorder %s231, %s245
    %p247 = scmp.eq.s32.totalorder %s22, 0
    %p248 = por %p246, %p247
    %s250 = sadd.s32 %s249, 1
    %p253 = scmp.eq.s32.totalorder %s16, 1
    %p254 = scmp.ne.s32.totalorder %s249, %s251
    %p255 = scmp.eq.s32.totalorder %s16, 0
    %p256 = por %p254, %p255
    %p257 = scmp.ne.s32.totalorder %s249, %s251
    %p258 = scmp.eq.s32.totalorder %s21, 1
    %p259 = por %p257, %p258
    %p260 = scmp.ne.s32.totalorder %s251, %s252
    %p261 = scmp.eq.s32.totalorder %s21, 0
    %p262 = por %p260, %p261
    %p263 = scmp.ne.s32.totalorder %s251, %s252
    %p264 = scmp.eq.s32.totalorder %s22, 1
    %p265 = por %p263, %p264
    %p267 = scmp.ne.s32.totalorder %s252, %s266
    %p268 = scmp.eq.s32.totalorder %s22, 0
    %p269 = por %p267, %p268
    %s270 = ssub.s32 %s23, %s35
    %s271 = ssub.s32 %s24, %s31
    %s272 = sor.u32 %s270, %s271
    %p273 = scmp.eq.s32.totalorder %s272, 0
    %s275 = sadd.s32 %s274, 1
    %s276 = scalar_select %p273, %s274, %s275
    %p279 = pneg %p273
    %p280 = scmp.eq.s32.totalorder %s16, 1
    %p281 = por %p279, %p280
    %p282 = scmp.ne.s32.totalorder %s274, %s277
    %p283 = scmp.eq.s32.totalorder %s16, 0
    %p284 = por %p282, %p283
    %p285 = scmp.ne.s32.totalorder %s274, %s277
    %p286 = scmp.eq.s32.totalorder %s21, 1
    %p287 = por %p285, %p286
    %p288 = scmp.ne.s32.totalorder %s277, %s278
    %p289 = scmp.eq.s32.totalorder %s21, 0
    %p290 = por %p288, %p289
    %p291 = scmp.ne.s32.totalorder %s277, %s278
    %p292 = scmp.eq.s32.totalorder %s22, 1
    %p293 = por %p291, %p292
    %p295 = scmp.ne.s32.totalorder %s278, %s294
    %p296 = scmp.eq.s32.totalorder %s22, 0
    %p297 = por %p295, %p296
    %p298 = scmp.le.s32.totalorder 1, %s16
    %p299 = scmp.lt.s32.totalorder %s16, 3
    %p300 = pnand %p298, %p299
    %p301 = pneg %p300
    // Predicated region
    $region9: #{bert_entity_encoder_forward.11} parent=5 // pred_check
      _
    $region10: #{bert_entity_encoder_forward.11} parent=5 // pred_check_branch
      %303 = sbr.rel (%p300) target = $region12
    $region11: #{bert_entity_encoder_forward.11} parent=5 // pred_region
      %s304 = ssub.s32 %s16, 1
      // Predicated region
      $region13: #{bert_entity_encoder_forward.11} parent=11 // pred_check
        %p305 = pneg %p157
      $region14: #{bert_entity_encoder_forward.11} parent=11 // pred_check_branch
        %307 = sbr.rel (%p305) target = $region16
      $region15: #{bert_entity_encoder_forward.11} parent=11 // pred_region
        _
      $region16: #{bert_entity_encoder_forward.11} parent=11 // pred_fallthru
        _
      // Predicated region
      $region17: #{bert_entity_encoder_forward.11} parent=11 // pred_check
        %p308 = pneg %p178
      $region18: #{bert_entity_encoder_forward.11} parent=11 // pred_check_branch
        %310 = sbr.rel (%p308) target = $region20
      $region19: #{bert_entity_encoder_forward.11} parent=11 // pred_region
        _
      $region20: #{bert_entity_encoder_forward.11} parent=11 // pred_fallthru
        _
      // Predicated region
      $region21: #{bert_entity_encoder_forward.11} parent=11 // pred_check
        %p311 = pneg %p199
      $region22: #{bert_entity_encoder_forward.11} parent=11 // pred_check_branch
        %313 = sbr.rel (%p311) target = $region24
      $region23: #{bert_entity_encoder_forward.11} parent=11 // pred_region
        _
      $region24: #{bert_entity_encoder_forward.11} parent=11 // pred_fallthru
        _
      // Predicated region
      $region25: #{bert_entity_encoder_forward.11} parent=11 // pred_check
        %p314 = pneg %p220
      $region26: #{bert_entity_encoder_forward.11} parent=11 // pred_check_branch
        %316 = sbr.rel (%p314) target = $region28
      $region27: #{bert_entity_encoder_forward.11} parent=11 // pred_region
        _
      $region28: #{bert_entity_encoder_forward.11} parent=11 // pred_fallthru
        _
      // Predicated region
      $region29: #{bert_entity_encoder_forward.11} parent=11 // pred_check
        %p317 = pneg %p241
      $region30: #{bert_entity_encoder_forward.11} parent=11 // pred_check_branch
        %319 = sbr.rel (%p317) target = $region32
      $region31: #{bert_entity_encoder_forward.11} parent=11 // pred_region
        _
      $region32: #{bert_entity_encoder_forward.11} parent=11 // pred_fallthru
        _
      // Predicated region
      $region33: #{bert_entity_encoder_forward.11} parent=11 // pred_check
        %p320 = pneg %p262
      $region34: #{bert_entity_encoder_forward.11} parent=11 // pred_check_branch
        %322 = sbr.rel (%p320) target = $region36
      $region35: #{bert_entity_encoder_forward.11} parent=11 // pred_region
        _
      $region36: #{bert_entity_encoder_forward.11} parent=11 // pred_fallthru
        _
    $region12: #{bert_entity_encoder_forward.11} parent=5 // pred_fallthru
      _
    %p323 = scmp.lt.s32.totalorder %s16, 2
    // Predicated region
    $region37: #{bert_entity_encoder_forward.11} parent=5 // pred_check
      %p324 = pneg %p323
    $region38: #{bert_entity_encoder_forward.11} parent=5 // pred_check_branch
      %326 = sbr.rel (%p324) target = $region40
    $region39: #{bert_entity_encoder_forward.11} parent=5 // pred_region
      // Predicated region
      $region41: #{bert_entity_encoder_forward.11} parent=39 // pred_check
        %p327 = pneg %p50
      $region42: #{bert_entity_encoder_forward.11} parent=39 // pred_check_branch
        %329 = sbr.rel (%p327) target = $region44
      $region43: #{bert_entity_encoder_forward.11} parent=39 // pred_region
        %p330 = scmp.lt.s32.totalorder %s23, 1
        %s331 = scalar_select %p330, %s23, 1
        %p332 = scmp.lt.s32.totalorder %s24, 0
        %s333 = scalar_select %p332, %s24, 0
        %s334 = sadd.s32 %s333, %s331
        %s335 = smul.addr %s334, 4
        %s336 = scalar_lea.vmem %s0, %s335
      $region44: #{bert_entity_encoder_forward.11} parent=39 // pred_fallthru
        _
      // Predicated region
      $region45: #{bert_entity_encoder_forward.11} parent=39 // pred_check
        %p337 = pneg %p76
      $region46: #{bert_entity_encoder_forward.11} parent=39 // pred_check_branch
        %339 = sbr.rel (%p337) target = $region48
      $region47: #{bert_entity_encoder_forward.11} parent=39 // pred_region
        %p340 = scmp.lt.s32.totalorder %s23, 1
        %s341 = scalar_select %p340, %s23, 1
        %s342 = smul.addr %s341, 8
        %s343 = smul.addr %s342, 4
        %s344 = scalar_lea.vmem %s1, %s343
      $region48: #{bert_entity_encoder_forward.11} parent=39 // pred_fallthru
        _
      // Predicated region
      $region49: #{bert_entity_encoder_forward.11} parent=39 // pred_check
        %p345 = pneg %p102
      $region50: #{bert_entity_encoder_forward.11} parent=39 // pred_check_branch
        %347 = sbr.rel (%p345) target = $region52
      $region51: #{bert_entity_encoder_forward.11} parent=39 // pred_region
        %p348 = scmp.lt.s32.totalorder %s23, 1
        %s349 = scalar_select %p348, %s23, 1
        %s350 = smul.addr %s349, 4
        %s351 = smul.addr %s350, 4
        %s352 = scalar_lea.vmem %s2, %s351
      $region52: #{bert_entity_encoder_forward.11} parent=39 // pred_fallthru
        _
      // Predicated region
      $region53: #{bert_entity_encoder_forward.11} parent=39 // pred_check
        %p353 = pneg %p130
      $region54: #{bert_entity_encoder_forward.11} parent=39 // pred_check_branch
        %355 = sbr.rel (%p353) target = $region56
      $region55: #{bert_entity_encoder_forward.11} parent=39 // pred_region
        %p356 = scmp.lt.s32.totalorder %s23, 1
        %s357 = scalar_select %p356, %s23, 1
        %p358 = scmp.lt.s32.totalorder %s24, 0
        %s359 = scalar_select %p358, %s24, 0
        %s360 = sadd.s32 %s359, %s357
        %s361 = smul.addr %s360, 8
        %s362 = scalar_lea.vmem %s3, %s361
      $region56: #{bert_entity_encoder_forward.11} parent=39 // pred_fallthru
        _
    $region40: #{bert_entity_encoder_forward.11} parent=5 // pred_fallthru
      _
    %p363 = scmp.le.s32.totalorder 1, %s16
    %p364 = scmp.lt.s32.totalorder %s16, 3
    %p365 = pnand %p363, %p364
    %p366 = pneg %p365
    // Predicated region
    $region57: #{bert_entity_encoder_forward.11} parent=5 // pred_check
      _
    $region58: #{bert_entity_encoder_forward.11} parent=5 // pred_check_branch
      %368 = sbr.rel (%p365) target = $region60
    $region59: #{bert_entity_encoder_forward.11} parent=5 // pred_region
      %s369 = ssub.s32 %s16, 1
      %p370 = scmp.lt.s32.totalorder %s25, 1
      %s371 = scalar_select %p370, %s25, 1
      %p372 = scmp.lt.s32.totalorder %s26, 0
      %s373 = scalar_select %p372, %s26, 0
      %s374 = sadd.s32 %s373, %s371
      %s375 = smul.addr %s374, 4
      %s376 = scalar_lea.vmem %s0, %s375
      %p377 = pneg %p56
      %p378 = pneg %p53
      %p379 = scmp.lt.s32.totalorder %s25, 1
      %s380 = scalar_select %p379, %s25, 1
      %s381 = smul.addr %s380, 8
      %s382 = smul.addr %s381, 4
      %s383 = scalar_lea.vmem %s1, %s382
      %p384 = pneg %p82
      %p385 = pneg %p79
      %p386 = scmp.lt.s32.totalorder %s25, 1
      %s387 = scalar_select %p386, %s25, 1
      %s388 = smul.addr %s387, 4
      %s389 = smul.addr %s388, 4
      %s390 = scalar_lea.vmem %s2, %s389
      %p391 = pneg %p108
      %p392 = pneg %p105
      %p393 = scmp.lt.s32.totalorder %s25, 1
      %s394 = scalar_select %p393, %s25, 1
      %p395 = scmp.lt.s32.totalorder %s26, 0
      %s396 = scalar_select %p395, %s26, 0
      %s397 = sadd.s32 %s396, %s394
      %s398 = smul.addr %s397, 8
      %s399 = scalar_lea.vmem %s3, %s398
      %p400 = pneg %p136
      %p401 = pneg %p133
      %p402 = pneg %p157
      %p403 = pneg %p154
      %p404 = pneg %p178
      %p405 = pneg %p175
      %p406 = pneg %p199
      %p407 = pneg %p196
      %p408 = pneg %p220
      %p409 = pneg %p217
      %p410 = pneg %p241
      %p411 = pneg %p238
      %p412 = pneg %p262
      %p413 = pneg %p259
      %p414 = pneg %p290
      %p415 = pneg %p287
      %p416 = scmp.lt.s32.totalorder %s25, 1
      %s417 = scalar_select %p416, %s25, 1
      %p418 = scmp.lt.s32.totalorder %s26, 0
      %s419 = scalar_select %p418, %s26, 0
      %s420 = sadd.s32 %s419, %s417
      %s421 = smul.addr %s420, 4
      %s422 = scalar_lea.vmem %s10, %s421
      %p423 = scmp.lt.s32.totalorder %s25, 1
      %s424 = scalar_select %p423, %s25, 1
      %p425 = scmp.lt.s32.totalorder %s26, 0
      %s426 = scalar_select %p425, %s26, 0
      %s427 = sadd.s32 %s426, %s424
      %s428 = smul.addr %s427, 4
      %s429 = scalar_lea.vmem %s0, %s428
      %p430 = scmp.lt.s32.totalorder %s25, 1
      %s431 = scalar_select %p430, %s25, 1
      %s432 = smul.addr %s431, 8
      %s433 = smul.addr %s432, 4
      %s434 = scalar_lea.vmem %s1, %s433
      %p435 = scmp.lt.s32.totalorder %s25, 1
      %s436 = scalar_select %p435, %s25, 1
      %s437 = smul.addr %s436, 4
      %s438 = smul.addr %s437, 4
      %s439 = scalar_lea.vmem %s2, %s438
      %p440 = scmp.lt.s32.totalorder %s25, 1
      %s441 = scalar_select %p440, %s25, 1
      %p442 = scmp.lt.s32.totalorder %s26, 0
      %s443 = scalar_select %p442, %s26, 0
      %s444 = sadd.s32 %s443, %s441
      %s445 = smul.addr %s444, 8
      %s446 = scalar_lea.vmem %s3, %s445
      %p447 = scmp.lt.s32.totalorder %s25, 1
      %s448 = scalar_select %p447, %s25, 1
      %p449 = scmp.lt.s32.totalorder %s26, 0
      %s450 = scalar_select %p449, %s26, 0
      %s451 = sadd.s32 %s450, %s448
      %s452 = smul.addr %s451, 4
      %s453 = scalar_lea.vmem %s10, %s452
      %v455 = vld [vmem:[%s429] sm:$0xf]
      %v456 = vld [vmem:[%s5] sm:$0xf]
      %v457 = vld [vmem:[%s5 + $0x4] sm:$0xf]
      %v458 = vld [vmem:[%s5 + $0x8] sm:$0xf]
      %v459 = vld [vmem:[%s5 + $0xc] sm:$0xf]
      %v460 = vld [vmem:[%s5 + $0x10] sm:$0xf]
      %v461 = vld [vmem:[%s5 + $0x14] sm:$0xf]
      %v462 = vld [vmem:[%s5 + $0x18] sm:$0xf]
      %v463 = vld [vmem:[%s5 + $0x1c] sm:$0xf]
      %v464 = vld [vmem:[%s6] sm:$0x1]
      %v466 = vlaneseq
      %v467 = vshrl.u32 %v466, 7
      %v468 = vsub.s32 0, %v467
      %v469 = vrot.slane %v464, %v468
      %v479 = vunpack.c.l.b16 %v456
      %v480 = vunpack.c.l.b16 %v457
      %v481 = vunpack.c.l.b16 %v458
      %v482 = vunpack.c.l.b16 %v459
      %v483 = vunpack.c.l.b16 %v460
      %v484 = vunpack.c.l.b16 %v461
      %v485 = vunpack.c.l.b16 %v462
      %v486 = vunpack.c.l.b16 %v463
      %v487 = vpack.c.b16 %v480, %v479
      %v488 = vpack.c.b16 %v482, %v481
      %v489 = vpack.c.b16 %v484, %v483
      %v490 = vpack.c.b16 %v486, %v485
      %vm495 = vcmask 523264
      %v497 = vsel %vm495, %v455, 0
      %499 = vmatprep.subr.bf16.mxu0 0
      %500 = vmatpush1.bf16.msra.mxu0 0
      %501 = vmatprep.subr.bf16.mxu0 0
      %502 = vmatpush1.bf16.msra.mxu0 0
      %503 = vmatprep.subr.bf16.mxu0 0
      %504 = vmatpush1.bf16.msra.mxu0 0
      %505 = vmatprep.subr.bf16.mxu0 0
      %506 = vmatpush1.bf16.msra.mxu0 0
      %507 = vmatprep.subr.bf16.mxu0 0
      %508 = vmatpush1.bf16.msra.mxu0 %v490
      %509 = vmatprep.subr.bf16.mxu0 0
      %510 = vmatpush1.bf16.msra.mxu0 %v489
      %511 = vmatprep.subr.bf16.mxu0 0
      %512 = vmatpush1.bf16.msra.mxu0 %v488
      %513 = vmatprep.subr.bf16.mxu0 0
      %514 = vmatpush1.bf16.msra.mxu0 %v487
      %515 = vmatprep.subr.bf16.mxu0 0
      %516 = vmatpush2.bf16.msra.mxu0 0
      %517 = vmatprep.subr.bf16.mxu0 0
      %518 = vmatpush2.bf16.msra.mxu0 0
      %519 = vmatprep.subr.bf16.mxu0 0
      %520 = vmatpush2.bf16.msra.mxu0 0
      %521 = vmatprep.subr.bf16.mxu0 0
      %522 = vmatpush2.bf16.msra.mxu0 0
      %523 = vmatprep.subr.bf16.mxu0 0
      %524 = vmatpush2.bf16.msra.mxu0 0
      %525 = vmatprep.subr.bf16.mxu0 0
      %526 = vmatpush2.bf16.msra.mxu0 0
      %527 = vmatprep.subr.bf16.mxu0 0
      %528 = vmatpush2.bf16.msra.mxu0 0
      %529 = vmatprep.subr.bf16.mxu0 0
      %530 = vmatpush2.bf16.msra.mxu0 0
      %531 = vmatprep.mubr.bf16.mxu0 0
      %532 = vmatmul.mubr.bf16.gmra.mxu0 %v497
      %v533 = vpop.f32.mrf.mxu0
      %v534 = vadd.f32 %v469, %v533
      %v535 = vpop.f32.mrf.mxu0
      %v536 = vpop.f32.mrf.mxu0
      %v537 = vpop.f32.mrf.mxu0
      %538 = vdwg.mxu0
      %v539 = vpack.c.bf16 %v534, %v534
      %v540 = vld [vmem:[%s434] sm:$0xf]
      %v541 = vld [vmem:[%s434 + $0x4] sm:$0xf]
      %v542 = vld [vmem:[%s434 + $0x8] sm:$0xf]
      %v543 = vld [vmem:[%s434 + $0xc] sm:$0xf]
      %v544 = vld [vmem:[%s434 + $0x10] sm:$0xf]
      %v545 = vld [vmem:[%s434 + $0x14] sm:$0xf]
      %v546 = vld [vmem:[%s434 + $0x18] sm:$0xf]
      %v547 = vld [vmem:[%s434 + $0x1c] sm:$0xf]
      %v556 = vunpack.c.l.b16 %v540
      %v557 = vunpack.c.l.b16 %v541
      %v558 = vunpack.c.l.b16 %v542
      %v559 = vunpack.c.l.b16 %v543
      %v560 = vunpack.c.l.b16 %v544
      %v561 = vunpack.c.l.b16 %v545
      %v562 = vunpack.c.l.b16 %v546
      %v563 = vunpack.c.l.b16 %v547
      %v564 = vpack.c.b16 %v557, %v556
      %v565 = vpack.c.b16 %v559, %v558
      %v566 = vpack.c.b16 %v561, %v560
      %v567 = vpack.c.b16 %v563, %v562
      %v573 = vsel %vm495, %v539, 0
      %575 = vmatprep.subr.bf16.mxu0 0
      %576 = vmatpush1.bf16.msra.mxu0 0
      %577 = vmatprep.subr.bf16.mxu0 0
      %578 = vmatpush1.bf16.msra.mxu0 0
      %579 = vmatprep.subr.bf16.mxu0 0
      %580 = vmatpush1.bf16.msra.mxu0 0
      %581 = vmatprep.subr.bf16.mxu0 0
      %582 = vmatpush1.bf16.msra.mxu0 0
      %583 = vmatprep.subr.bf16.mxu0 0
      %584 = vmatpush1.bf16.msra.mxu0 %v567
      %585 = vmatprep.subr.bf16.mxu0 0
      %586 = vmatpush1.bf16.msra.mxu0 %v566
      %587 = vmatprep.subr.bf16.mxu0 0
      %588 = vmatpush1.bf16.msra.mxu0 %v565
      %589 = vmatprep.subr.bf16.mxu0 0
      %590 = vmatpush1.bf16.msra.mxu0 %v564
      %591 = vmatprep.subr.bf16.mxu0 0
      %592 = vmatpush2.bf16.msra.mxu0 0
      %593 = vmatprep.subr.bf16.mxu0 0
      %594 = vmatpush2.bf16.msra.mxu0 0
      %595 = vmatprep.subr.bf16.mxu0 0
      %596 = vmatpush2.bf16.msra.mxu0 0
      %597 = vmatprep.subr.bf16.mxu0 0
      %598 = vmatpush2.bf16.msra.mxu0 0
      %599 = vmatprep.subr.bf16.mxu0 0
      %600 = vmatpush2.bf16.msra.mxu0 0
      %601 = vmatprep.subr.bf16.mxu0 0
      %602 = vmatpush2.bf16.msra.mxu0 0
      %603 = vmatprep.subr.bf16.mxu0 0
      %604 = vmatpush2.bf16.msra.mxu0 0
      %605 = vmatprep.subr.bf16.mxu0 0
      %606 = vmatpush2.bf16.msra.mxu0 0
      %607 = vmatprep.mubr.bf16.mxu0 0
      %608 = vmatmul.mubr.bf16.gmra.mxu0 %v573
      %v609 = vpop.f32.mrf.mxu0
      %v610 = vadd.f32 0.0, %v609
      %v611 = vpop.f32.mrf.mxu0
      %v612 = vpop.f32.mrf.mxu0
      %v613 = vpop.f32.mrf.mxu0
      %614 = vdwg.mxu0
      %v615 = vmul.f32 %v610, 0.35355338
      %v616 = vld [vmem:[%s446] sm:$0xff]
      %vm617 = vcmp.eq.f32.partialorder %v616, 0.0
      %v618 = vsel %vm617, 1, 0
      %619 = vset.pattern.permute.xlu0 0
      %620 = vperm.xlu0 %619, %v618
      %v621 = vpop.permute.xlu0 %620
      %vm622 = vcmp.eq.s32.totalorder %v621, 1
      %v623 = vsel %vm622, -10000.0, %v615
      %vm624 = vcmask 261120
      %v625 = vsel %vm624, %v623, -inf
      %626 = vmax.xlane.f32.xlu0 %v625
      %v627 = vpop.xlane.xlu0 %626
      %v628 = vsub.f32 %v623, %v627
      %v629 = vmul.f32 %v628, 1.442695
      %v630 = vpow.pop %v629
      %v631 = vld [vmem:[%s4] sm:$0xff]
      %v632 = vld [vmem:[%s4 + $0x8] sm:$0xff]
      %v633 = vld [vmem:[%s4 + $0x10] sm:$0xff]
      %v634 = vld [vmem:[%s4 + $0x18] sm:$0xff]
      %v636 = vsel %vm624, %v630, 0
      %638 = vmatprep.subr.mxu0 0.0
      %639 = vmatpush1.msra.mxu0 0.0
      %640 = vmatprep.subr.mxu0 0.0
      %641 = vmatpush1.msra.mxu0 0.0
      %642 = vmatprep.subr.mxu0 0.0
      %643 = vmatpush1.msra.mxu0 0.0
      %644 = vmatprep.subr.mxu0 0.0
      %645 = vmatpush1.msra.mxu0 0.0
      %646 = vmatprep.subr.mxu0 0.0
      %647 = vmatpush1.msra.mxu0 0.0
      %648 = vmatprep.subr.mxu0 0.0
      %649 = vmatpush1.msra.mxu0 0.0
      %650 = vmatprep.subr.mxu0 0.0
      %651 = vmatpush1.msra.mxu0 0.0
      %652 = vmatprep.subr.mxu0 0.0
      %653 = vmatpush1.msra.mxu0 0.0
      %654 = vmatprep.subr.mxu0 0.0
      %655 = vmatpush1.msra.mxu0 0.0
      %656 = vmatprep.subr.mxu0 0.0
      %657 = vmatpush1.msra.mxu0 0.0
      %658 = vmatprep.subr.mxu0 0.0
      %659 = vmatpush1.msra.mxu0 0.0
      %660 = vmatprep.subr.mxu0 0.0
      %661 = vmatpush1.msra.mxu0 0.0
      %662 = vmatprep.subr.mxu0 0.0
      %663 = vmatpush1.msra.mxu0 %v634
      %664 = vmatprep.subr.mxu0 0.0
      %665 = vmatpush1.msra.mxu0 %v633
      %666 = vmatprep.subr.mxu0 0.0
      %667 = vmatpush1.msra.mxu0 %v632
      %668 = vmatprep.subr.mxu0 0.0
      %669 = vmatpush1.msra.mxu0 %v631
      %670 = vmatprep.subr.mxu0 0.0
      %671 = vmatpush2.msra.mxu0 0.0
      %672 = vmatprep.subr.mxu0 0.0
      %673 = vmatpush2.msra.mxu0 0.0
      %674 = vmatprep.subr.mxu0 0.0
      %675 = vmatpush2.msra.mxu0 0.0
      %676 = vmatprep.subr.mxu0 0.0
      %677 = vmatpush2.msra.mxu0 0.0
      %678 = vmatprep.subr.mxu0 0.0
      %679 = vmatpush2.msra.mxu0 0.0
      %680 = vmatprep.subr.mxu0 0.0
      %681 = vmatpush2.msra.mxu0 0.0
      %682 = vmatprep.subr.mxu0 0.0
      %683 = vmatpush2.msra.mxu0 0.0
      %684 = vmatprep.subr.mxu0 0.0
      %685 = vmatpush2.msra.mxu0 0.0
      %686 = vmatprep.subr.mxu0 0.0
      %687 = vmatpush2.msra.mxu0 0.0
      %688 = vmatprep.subr.mxu0 0.0
      %689 = vmatpush2.msra.mxu0 0.0
      %690 = vmatprep.subr.mxu0 0.0
      %691 = vmatpush2.msra.mxu0 0.0
      %692 = vmatprep.subr.mxu0 0.0
      %693 = vmatpush2.msra.mxu0 0.0
      %694 = vmatprep.subr.mxu0 0.0
      %695 = vmatpush2.msra.mxu0 0.0
      %696 = vmatprep.subr.mxu0 0.0
      %697 = vmatpush2.msra.mxu0 0.0
      %698 = vmatprep.subr.mxu0 0.0
      %699 = vmatpush2.msra.mxu0 0.0
      %700 = vmatprep.subr.mxu0 0.0
      %701 = vmatpush2.msra.mxu0 0.0
      %702 = vmatprep.mubr.f32.mxu0 0.0
      %703 = vmatmul.mubr.f32.gmra.mxu0 %v636
      %v704 = vpop.f32.mrf.mxu0
      %v705 = vadd.f32 0.0, %v704
      %v706 = vpop.f32.mrf.mxu0
      %707 = vdwg.mxu0
      %v708 = vrcp.pop %v705
      %v709 = vmul.f32 %v630, %v708
      %v710 = vpack.c.bf16 %v709, %v709
      %v711 = vld [vmem:[%s439] sm:$0xf]
      %v712 = vld [vmem:[%s439 + $0x4] sm:$0xf]
      %v713 = vld [vmem:[%s439 + $0x8] sm:$0xf]
      %v714 = vld [vmem:[%s439 + $0xc] sm:$0xf]
      %v715 = vld [vmem:[%s7] sm:$0x1]
      %v717 = vlaneseq
      %v718 = vshrl.u32 %v717, 7
      %v719 = vsub.s32 0, %v718
      %v720 = vrot.slane %v715, %v719
      %v726 = vunpack.c.l.b16 %v711
      %v727 = vunpack.c.l.b16 %v712
      %v728 = vunpack.c.l.b16 %v713
      %v729 = vunpack.c.l.b16 %v714
      %v730 = vpack.c.b16 %v727, %v726
      %v731 = vpack.c.b16 %v729, %v728
      %v735 = vsel %vm624, %v710, 0
      %737 = vmatprep.subr.bf16.mxu0 0
      %738 = vmatpush1.bf16.msra.mxu0 0
      %739 = vmatprep.subr.bf16.mxu0 0
      %740 = vmatpush1.bf16.msra.mxu0 0
      %741 = vmatprep.subr.bf16.mxu0 0
      %742 = vmatpush1.bf16.msra.mxu0 0
      %743 = vmatprep.subr.bf16.mxu0 0
      %744 = vmatpush1.bf16.msra.mxu0 0
      %745 = vmatprep.subr.bf16.mxu0 0
      %746 = vmatpush1.bf16.msra.mxu0 0
      %747 = vmatprep.subr.bf16.mxu0 0
      %748 = vmatpush1.bf16.msra.mxu0 0
      %749 = vmatprep.subr.bf16.mxu0 0
      %750 = vmatpush1.bf16.msra.mxu0 %v731
      %751 = vmatprep.subr.bf16.mxu0 0
      %752 = vmatpush1.bf16.msra.mxu0 %v730
      %753 = vmatprep.subr.bf16.mxu0 0
      %754 = vmatpush2.bf16.msra.mxu0 0
      %755 = vmatprep.subr.bf16.mxu0 0
      %756 = vmatpush2.bf16.msra.mxu0 0
      %757 = vmatprep.subr.bf16.mxu0 0
      %758 = vmatpush2.bf16.msra.mxu0 0
      %759 = vmatprep.subr.bf16.mxu0 0
      %760 = vmatpush2.bf16.msra.mxu0 0
      %761 = vmatprep.subr.bf16.mxu0 0
      %762 = vmatpush2.bf16.msra.mxu0 0
      %763 = vmatprep.subr.bf16.mxu0 0
      %764 = vmatpush2.bf16.msra.mxu0 0
      %765 = vmatprep.subr.bf16.mxu0 0
      %766 = vmatpush2.bf16.msra.mxu0 0
      %767 = vmatprep.subr.bf16.mxu0 0
      %768 = vmatpush2.bf16.msra.mxu0 0
      %769 = vmatprep.mubr.bf16.mxu0 0
      %770 = vmatmul.mubr.bf16.gmra.mxu0 %v735
      %v771 = vpop.f32.mrf.mxu0
      %v772 = vadd.f32 %v720, %v771
      %v773 = vpop.f32.mrf.mxu0
      %v774 = vpop.f32.mrf.mxu0
      %v775 = vpop.f32.mrf.mxu0
      %776 = vdwg.mxu0
      %v777 = vunpack.c.l.bf16 %v455
      %v778 = vadd.f32 %v772, %v777
      %v779 = vsel %vm495, %v778, 0.0
      %780 = vadd.xlane.f32.xlu0 %v779
      %v781 = vpop.xlane.xlu0 %780
      %v782 = vrcp.pop 64.0
      %v783 = vmul.f32 %v781, %v782
      %v784 = vsub.f32 %v778, %v783
      %v785 = vmul.f32 %v784, %v784
      %v786 = vsel %vm495, %v785, 0.0
      %787 = vadd.xlane.f32.xlu0 %v786
      %v788 = vpop.xlane.xlu0 %787
      %v789 = vmul.f32 %v788, %v782
      %v790 = vadd.f32 %v789, 1e-12
      %v791 = vrsqrt.pop %v790
      %v792 = vmul.f32 %v784, %v791
      %v793 = vld [vmem:[%s8] sm:$0x1]
      %v795 = vlaneseq
      %v796 = vshrl.u32 %v795, 7
      %v797 = vsub.s32 0, %v796
      %v798 = vrot.slane %v793, %v797
      %v800 = vmul.f32 %v792, %v798
      %v801 = vld [vmem:[%s9] sm:$0x1]
      %v803 = vlaneseq
      %v804 = vshrl.u32 %v803, 7
      %v805 = vsub.s32 0, %v804
      %v806 = vrot.slane %v801, %v805
      %v808 = vadd.f32 %v800, %v806
      %v809 = vpack.c.bf16 %v808, %v808
      %vm810 = vcmask 519168
      %811 = vst.msk [vmem:[%s453] sm:$0xf] %vm810, %v809
      %p812 = scmp.lt.s32.totalorder %s25, 1
      %s813 = scalar_select %p812, %s25, 1
      %p814 = scmp.lt.s32.totalorder %s26, 0
      %s815 = scalar_select %p814, %s26, 0
      %s816 = sadd.s32 %s815, %s813
      %s817 = smul.addr %s816, 4
      %s818 = scalar_lea.vmem %s10, %s817
      // Predicated region
      $region61: #{bert_entity_encoder_forward.11} parent=59 // pred_check
        %p819 = pneg %p287
      $region62: #{bert_entity_encoder_forward.11} parent=59 // pred_check_branch
        %821 = sbr.rel (%p819) target = $region64
      $region63: #{bert_entity_encoder_forward.11} parent=59 // pred_region
        _
      $region64: #{bert_entity_encoder_forward.11} parent=59 // pred_fallthru
        _
    $region60: #{bert_entity_encoder_forward.11} parent=5 // pred_fallthru
      _
    %p822 = scmp.le.s32.totalorder 2, %s16
    // Predicated region
    $region65: #{bert_entity_encoder_forward.11} parent=5 // pred_check
      %p823 = pneg %p822
    $region66: #{bert_entity_encoder_forward.11} parent=5 // pred_check_branch
      %825 = sbr.rel (%p823) target = $region68
    $region67: #{bert_entity_encoder_forward.11} parent=5 // pred_region
      %s826 = ssub.s32 %s16, 2
      // Predicated region
      $region69: #{bert_entity_encoder_forward.11} parent=67 // pred_check
        %p827 = pneg %p293
      $region70: #{bert_entity_encoder_forward.11} parent=67 // pred_check_branch
        %829 = sbr.rel (%p827) target = $region72
      $region71: #{bert_entity_encoder_forward.11} parent=67 // pred_region
        %p830 = scmp.lt.s32.totalorder %s27, 1
        %s831 = scalar_select %p830, %s27, 1
        %p832 = scmp.lt.s32.totalorder %s28, 0
        %s833 = scalar_select %p832, %s28, 0
        %s834 = sadd.s32 %s833, %s831
        %s835 = smul.addr %s834, 4
        %s836 = scalar_lea.vmem %s10, %s835
      $region72: #{bert_entity_encoder_forward.11} parent=67 // pred_fallthru
        _
    $region68: #{bert_entity_encoder_forward.11} parent=5 // pred_fallthru
      _
  $region6: #{bert_entity_encoder_forward.11} parent=0 // loop_footer
    %s20 = sadd.s32 1, %s16
  $region7: #{bert_entity_encoder_forward.11} parent=0 // loop_footer_branch
    %15 = sbr.rel target = $region3
  $region8: #{bert_entity_encoder_forward.11} parent=0 // loop_exit
    _

// kernel: bert_entity_encoder_forward.13
$region0: #{bert_entity_encoder_forward.13}
  #allocation0 [shape = 'u32[]', space=smem, size = 0x4, offset = 0x4, fixed_abs, tag = 'smem constant byte address 0x4 - core index']
  #allocation1 [shape = 'u32[144,128]{1,0:T(1,128)}', space=vmem, size = 0x12000, scoped, tag = 'internal scratch']
  #allocation2 [shape = 'f32[2,64]{1,0:T(2,128)}', space=vmem, size = 0x400, scoped, tag = 'scratch operand']
  %s0 = inlined_call_operand.vmem [shape: bf16[2,192], index: 0, kind: input, shape index: {}]
  %s1 = inlined_call_operand.vmem [shape: bf16[192,64], index: 1, kind: input, shape index: {}]
  %s2 = inlined_call_operand.vmem [shape: f32[1,64], index: 2, kind: input, shape index: {}]
  %s3 = inlined_call_operand.hbm [shape: f32[2,64], index: 3, kind: output, shape index: {}]
  %s4 = sld [smem:[#allocation0]]
  $region30: #{bert_entity_encoder_forward.13} parent=0
    _
  %s6 = ssub.s32 1, %s4
  %s7 = scalar_select 0, %s6, %s4
  $region1: #{bert_entity_encoder_forward.13} parent=0
    #allocation3 [shape = 'u8[1024]{0}', space=vmem, size = 0x400, scoped, tag = 'output window, operand 0, single buffered']
    #allocation4 [shape = 's32[1]{0}', space=sflag, size = 0x4, scoped, tag = 'scoped memory for bert_entity_encoder_forward.13']
    %8 = vsyncpa [#allocation4], 0
    // Predicated region
    $region2: #{bert_entity_encoder_forward.13} parent=1 // pred_check
      _
    $region3: #{bert_entity_encoder_forward.13} parent=1 // pred_check_branch
      %10 = sbr.rel (0) target = $region5
    $region4: #{bert_entity_encoder_forward.13} parent=1 // pred_region
      _
    $region5: #{bert_entity_encoder_forward.13} parent=1 // pred_fallthru
      _
    // Predicated region
    $region6: #{bert_entity_encoder_forward.13} parent=1 // pred_check
      _
    $region7: #{bert_entity_encoder_forward.13} parent=1 // pred_check_branch
      %12 = sbr.rel (0) target = $region9
    $region8: #{bert_entity_encoder_forward.13} parent=1 // pred_region
      _
    $region9: #{bert_entity_encoder_forward.13} parent=1 // pred_fallthru
      _
    // Predicated region
    $region10: #{bert_entity_encoder_forward.13} parent=1 // pred_check
      _
    $region11: #{bert_entity_encoder_forward.13} parent=1 // pred_check_branch
      %14 = sbr.rel (0) target = $region13
    $region12: #{bert_entity_encoder_forward.13} parent=1 // pred_region
      _
    $region13: #{bert_entity_encoder_forward.13} parent=1 // pred_fallthru
      _
    %p16 = scmp.eq.s32.totalorder 0, 0
    // Predicated region
    $region14: #{bert_entity_encoder_forward.13} parent=1 // pred_check
      %p17 = pneg %p16
    $region15: #{bert_entity_encoder_forward.13} parent=1 // pred_check_branch
      %19 = sbr.rel (%p17) target = $region17
    $region16: #{bert_entity_encoder_forward.13} parent=1 // pred_region
      %vm20 = vcmask 517120
      %21 = vst.msk [vmem:[#allocation2] sm:$0x3] %vm20, 0.0
    $region17: #{bert_entity_encoder_forward.13} parent=1 // pred_fallthru
      _
    %v22 = vld [vmem:[#allocation2] sm:$0x3]
    %v23 = vld [vmem:[%s0] sm:$0x3]
    %v24 = vld [vmem:[%s1] sm:$0xf]
    %v25 = vld [vmem:[%s1 + $0x4] sm:$0xf]
    %v26 = vld [vmem:[%s1 + $0x8] sm:$0xf]
    %v27 = vld [vmem:[%s1 + $0xc] sm:$0xf]
    %v28 = vld [vmem:[%s1 + $0x10] sm:$0xf]
    %v29 = vld [vmem:[%s1 + $0x14] sm:$0xf]
    %v30 = vld [vmem:[%s1 + $0x18] sm:$0xf]
    %v31 = vld [vmem:[%s1 + $0x1c] sm:$0xf]
    %v32 = vld [vmem:[%s1 + $0x20] sm:$0xf]
    %v33 = vld [vmem:[%s1 + $0x24] sm:$0xf]
    %v34 = vld [vmem:[%s1 + $0x28] sm:$0xf]
    %v35 = vld [vmem:[%s1 + $0x2c] sm:$0xf]
    %v36 = vld [vmem:[%s1 + $0x30] sm:$0xf]
    %v37 = vld [vmem:[%s1 + $0x34] sm:$0xf]
    %v38 = vld [vmem:[%s1 + $0x38] sm:$0xf]
    %v39 = vld [vmem:[%s1 + $0x3c] sm:$0xf]
    %v40 = vld [vmem:[%s1 + $0x40] sm:$0xf]
    %v41 = vld [vmem:[%s1 + $0x44] sm:$0xf]
    %v42 = vld [vmem:[%s1 + $0x48] sm:$0xf]
    %v43 = vld [vmem:[%s1 + $0x4c] sm:$0xf]
    %v44 = vld [vmem:[%s1 + $0x50] sm:$0xf]
    %v45 = vld [vmem:[%s1 + $0x54] sm:$0xf]
    %v46 = vld [vmem:[%s1 + $0x58] sm:$0xf]
    %v47 = vld [vmem:[%s1 + $0x5c] sm:$0xf]
    %v50 = vunpack.c.l.s4 1966171168
    %v51 = vunpack.c.0.s8 %v50
    %v52 = vlaneseq
    %v53 = vshrl.u32 %v52, 7
    %v54 = vsub.s32 %v51, %v53
    %v55 = vrot.slane %v23, %v54
    %v56 = vcombine.high %v55, %v55
    %v58 = vunpack.c.l.s4 1966171168
    %v59 = vunpack.c.0.s8 %v58
    %v60 = vlaneseq
    %v61 = vshrl.u32 %v60, 7
    %v62 = vsub.s32 %v59, %v61
    %v63 = vrot.slane %v55, %v62
    %v65 = vunpack.c.l.s4 1966171168
    %v66 = vunpack.c.0.s8 %v65
    %v67 = vlaneseq
    %v68 = vshrl.u32 %v67, 7
    %v69 = vsub.s32 %v66, %v68
    %v70 = vrot.slane %v56, %v69
    %v96 = vunpack.c.l.b16 %v24
    %v97 = vunpack.c.l.b16 %v25
    %v98 = vunpack.c.l.b16 %v26
    %v99 = vunpack.c.l.b16 %v27
    %v100 = vunpack.c.l.b16 %v28
    %v101 = vunpack.c.l.b16 %v29
    %v102 = vunpack.c.l.b16 %v30
    %v103 = vunpack.c.l.b16 %v31
    %v104 = vunpack.c.l.b16 %v32
    %v105 = vunpack.c.l.b16 %v33
    %v106 = vunpack.c.l.b16 %v34
    %v107 = vunpack.c.l.b16 %v35
    %v108 = vunpack.c.l.b16 %v36
    %v109 = vunpack.c.l.b16 %v37
    %v110 = vunpack.c.l.b16 %v38
    %v111 = vunpack.c.l.b16 %v39
    %v112 = vunpack.c.l.b16 %v40
    %v113 = vunpack.c.l.b16 %v41
    %v114 = vunpack.c.l.b16 %v42
    %v115 = vunpack.c.l.b16 %v43
    %v116 = vunpack.c.l.b16 %v44
    %v117 = vunpack.c.l.b16 %v45
    %v118 = vunpack.c.l.b16 %v46
    %v119 = vunpack.c.l.b16 %v47
    %v120 = vpack.c.b16 %v97, %v96
    %v121 = vpack.c.b16 %v99, %v98
    %v122 = vpack.c.b16 %v101, %v100
    %v123 = vpack.c.b16 %v103, %v102
    %v124 = vpack.c.b16 %v105, %v104
    %v125 = vpack.c.b16 %v107, %v106
    %v126 = vpack.c.b16 %v109, %v108
    %v127 = vpack.c.b16 %v111, %v110
    %v128 = vpack.c.b16 %v113, %v112
    %v129 = vpack.c.b16 %v115, %v114
    %v130 = vpack.c.b16 %v117, %v116
    %v131 = vpack.c.b16 %v119, %v118
    %vm144 = vcmask 523264
    %v146 = vsel %vm144, %v70, 0
    %148 = vmatprep.subr.bf16.mxu0 0
    %149 = vmatpush1.bf16.msra.mxu0 %v127
    %150 = vmatprep.subr.bf16.mxu0 0
    %151 = vmatpush1.bf16.msra.mxu0 %v126
    %152 = vmatprep.subr.bf16.mxu0 0
    %153 = vmatpush1.bf16.msra.mxu0 %v125
    %154 = vmatprep.subr.bf16.mxu0 0
    %155 = vmatpush1.bf16.msra.mxu0 %v124
    %156 = vmatprep.subr.bf16.mxu0 0
    %157 = vmatpush1.bf16.msra.mxu0 %v123
    %158 = vmatprep.subr.bf16.mxu0 0
    %159 = vmatpush1.bf16.msra.mxu0 %v122
    %160 = vmatprep.subr.bf16.mxu0 0
    %161 = vmatpush1.bf16.msra.mxu0 %v121
    %162 = vmatprep.subr.bf16.mxu0 0
    %163 = vmatpush1.bf16.msra.mxu0 %v120
    %164 = vmatprep.subr.bf16.mxu0 0
    %165 = vmatpush2.bf16.msra.mxu0 0
    %166 = vmatprep.subr.bf16.mxu0 0
    %167 = vmatpush2.bf16.msra.mxu0 0
    %168 = vmatprep.subr.bf16.mxu0 0
    %169 = vmatpush2.bf16.msra.mxu0 0
    %170 = vmatprep.subr.bf16.mxu0 0
    %171 = vmatpush2.bf16.msra.mxu0 0
    %172 = vmatprep.subr.bf16.mxu0 0
    %173 = vmatpush2.bf16.msra.mxu0 %v131
    %174 = vmatprep.subr.bf16.mxu0 0
    %175 = vmatpush2.bf16.msra.mxu0 %v130
    %176 = vmatprep.subr.bf16.mxu0 0
    %177 = vmatpush2.bf16.msra.mxu0 %v129
    %178 = vmatprep.subr.bf16.mxu0 0
    %179 = vmatpush2.bf16.msra.mxu0 %v128
    %180 = vmatprep.mubr.bf16.mxu0 %v146
    %181 = vmatmul.mubr.bf16.gmra.mxu0 %v63
    %v182 = vpop.f32.mrf.mxu0
    %v183 = vadd.f32 0.0, %v182
    %v184 = vpop.f32.mrf.mxu0
    %v185 = vpop.f32.mrf.mxu0
    %v186 = vpop.f32.mrf.mxu0
    %187 = vdwg.mxu0
    %v188 = vadd.f32 %v22, %v183
    %vm189 = vcmask 517120
    %190 = vst.msk [vmem:[#allocation2] sm:$0x3] %vm189, %v188
    // Predicated region
    $region18: #{bert_entity_encoder_forward.13} parent=1 // pred_check
      %p191 = pneg %p16
    $region19: #{bert_entity_encoder_forward.13} parent=1 // pred_check_branch
      %193 = sbr.rel (%p191) target = $region21
    $region20: #{bert_entity_encoder_forward.13} parent=1 // pred_region
      %v194 = vld [vmem:[#allocation2] sm:$0x3]
      %v195 = vld [vmem:[%s2] sm:$0x1]
      %v197 = vlaneseq
      %v198 = vshrl.u32 %v197, 7
      %v199 = vsub.s32 0, %v198
      %v200 = vrot.slane %v195, %v199
      %v202 = vadd.f32 %v194, %v200
      %203 = vst.msk [vmem:[#allocation3] sm:$0x3] %vm189, %v202
    $region21: #{bert_entity_encoder_forward.13} parent=1 // pred_fallthru
      _
    // Predicated region
    $region22: #{bert_entity_encoder_forward.13} parent=1 // pred_check
      _
    $region23: #{bert_entity_encoder_forward.13} parent=1 // pred_check_branch
      %205 = sbr.rel (0) target = $region25
    $region24: #{bert_entity_encoder_forward.13} parent=1 // pred_region
      %s207 = ssub.s32 32, 32
      %208 = vsyncadd [#allocation4], %s207
      %s210 = sshll.u32 [#allocation3], 4
      %s211 = int_to_ptr.vmem [resolvable:$true] %s210
      %213 = dma.vmem_to_hbm [thread:$0]  %s211, 32, %s3, [#allocation4]
    $region25: #{bert_entity_encoder_forward.13} parent=1 // pred_fallthru
      _
    // Predicated region
    $region26: #{bert_entity_encoder_forward.13} parent=1 // pred_check
      _
    $region27: #{bert_entity_encoder_forward.13} parent=1 // pred_check_branch
      %215 = sbr.rel (0) target = $region29
    $region28: #{bert_entity_encoder_forward.13} parent=1 // pred_region
      %216 = dma.done [#allocation4], 32
    $region29: #{bert_entity_encoder_forward.13} parent=1 // pred_fallthru
      _
    %217 = vsyncpa [#allocation4], 1

</llo_original>
